<compile_context>
chip_gen: v6e
topology: v6e:2x2x1
jax: 0.10.0
libtpu: 0.0.40
codegen_flags: <defaults>
</compile_context>

<pallas_src>
import jax
import jax.numpy as jnp
from jax.experimental import pallas as pl
from jax.experimental.pallas import tpu as pltpu


# ---------------------------------------------------------------------------
# Parameter init (PyTorch-default-style uniform), PyTorch layouts.
# ---------------------------------------------------------------------------
def init_params(key):
    ks = jax.random.split(key, 10)

    def u(k, shape, fan_in):
        bound = 1.0 / jnp.sqrt(jnp.float32(fan_in))
        return jax.random.uniform(k, shape, jnp.float32, -bound, bound)

    return {
        "conv1_w": u(ks[0], (6, 3, 5, 5), 3 * 25),
        "conv1_b": u(ks[1], (6,), 3 * 25),
        "conv2_w": u(ks[2], (16, 6, 5, 5), 6 * 25),
        "conv2_b": u(ks[3], (16,), 6 * 25),
        "fc1_w": u(ks[4], (120, 400), 400),
        "fc1_b": u(ks[5], (120,), 400),
        "fc2_w": u(ks[6], (84, 120), 120),
        "fc2_b": u(ks[7], (84,), 120),
        "fc3_w": u(ks[8], (10, 84), 84),
        "fc3_b": u(ks[9], (10,), 84),
    }


# ---------------------------------------------------------------------------
# One-time weight preprocessing into kernel-friendly, lane-dense layouts.
# ---------------------------------------------------------------------------
def _make_band(w, win, wout):
    """Banded conv weight of shape (K, win*cin, wout*cout).

    band[kh][wi*cin + ci, wo*cout + co] = w[co, ci, kh, wi - wo]
    for 0 <= wi - wo < K, else 0.  A conv then becomes, for each kh, a rank-2
    matmul of the row-shifted activation slab with band[kh].
    """
    cout, cin, K, _ = w.shape
    band = jnp.zeros((K, win, cin, wout, cout), jnp.float32)
    wo = jnp.arange(wout)
    for kw in range(K):
        # Advanced indices at dims 1 and 3 (non-adjacent) -> update shape is
        # (wout, K, cin, cout); the value broadcasts over the leading wout dim.
        val = jnp.transpose(w[:, :, :, kw], (2, 1, 0))[None]  # (1, K, cin, cout)
        band = band.at[:, wo + kw, :, wo, :].set(val)
    return band.reshape(K, win * cin, wout * cout)


def _make_lane_pool_sel(wout, cout):
    """0/1 matrix ((wout-1)*cout, (wout//2)*cout) selecting even-w lane groups
    after the lane-shifted pair-max (W direction of the 2x2 pool).  Exact in
    bf16."""
    wp = wout // 2
    sel = jnp.zeros((wout - 1, cout, wp, cout), jnp.float32)
    i = jnp.arange(wp)[:, None]
    c = jnp.arange(cout)[None, :]
    sel = sel.at[2 * i, c, i, c].set(1.0)
    return sel.reshape((wout - 1) * cout, wp * cout)


def prepare_params(params):
    """Pre-reshape all weights once (outside the hot path).  MXU operands go
    to bf16; biases stay f32 for the f32 epilogue.  Nothing depends on the
    batch tile anymore."""
    bf16 = jnp.bfloat16
    prep = {
        # conv1: input lanes w*3+c (Win=32), output lanes wo*6+co (Wo=28)
        "band1": _make_band(params["conv1_w"], 32, 28).astype(bf16),  # (5,96,168)
        "bias1": jnp.tile(params["conv1_b"], 28)[None, :],            # (1,168) f32
        "tw1": _make_lane_pool_sel(28, 6).astype(bf16),               # (162,84)
        # conv2: input lanes wp*6+c (Win=14), output lanes wo*16+co (Wo=10)
        "band2": _make_band(params["conv2_w"], 14, 10).astype(bf16),  # (5,84,160)
        "bias2": jnp.tile(params["conv2_b"], 10)[None, :],            # (1,160) f32
        "tw2": _make_lane_pool_sel(10, 16).astype(bf16),              # (144,80)
        "bfc1": params["fc1_b"][None, :],                             # (1,120) f32
        "w2t": params["fc2_w"].T.astype(bf16),                        # (120,84)
        "bfc2": params["fc2_b"][None, :],                             # (1,84) f32
        "w3t": params["fc3_w"].T.astype(bf16),                        # (84,10)
        "bfc3": params["fc3_b"][None, :],                             # (1,10) f32
    }
    # Stacked fc1 weight: the kernel's fc1 input lane index is
    # hp*80 + wp*16 + co, while PyTorch's .view(-1, 400) feature index is
    # co*25 + hp*5 + wp.  Fold that permutation in here:
    # w1s[hp*80 + wp*16 + co, n] = fc1_w[n, co*25 + hp*5 + wp].
    w1 = params["fc1_w"].reshape(120, 16, 5, 5)                       # (n,co,hp,wp)
    prep["w1s"] = jnp.transpose(w1, (2, 3, 1, 0)).reshape(400, 120).astype(bf16)
    return prep


# ---------------------------------------------------------------------------
# The single fused kernel.
#
# Row layout: every per-image row period is even, so the 2x2/2 H-pool is a
# global even/odd row pair-max:
#   stage 1: rows b*32 + h   (h in [0,32); conv1 valid for h<28)
#   stage 2: rows b*16 + k   (k in [0,16); pool1 valid for k<14, conv2 for k<10)
# Garbage rows (image straddle / tail) are computed but provably never read by
# any valid output.
# ---------------------------------------------------------------------------
def _lenet_kernel(x_ref, band1_ref, bias1_ref, tw1_ref,
                  band2_ref, bias2_ref, tw2_ref,
                  w1s_ref, bfc1_ref, w2t_ref, bfc2_ref, w3t_ref, bfc3_ref,
                  out_ref, s1_ref, s2_ref, s3_ref):
    f32, bf16 = jnp.float32, jnp.bfloat16
    K = 5
    R1 = x_ref.shape[0]            # tb*32
    tb = R1 // 32
    R2 = tb * 16
    r1 = R1 - (K - 1)              # conv1 rows computed
    r2 = R2 - (K - 1)              # conv2 rows computed

    # ---- conv1 + bias + relu: 5 band matmuls, shifted operands loaded
    # ---- straight from the (bf16) input block ref -------------------------
    acc = jnp.dot(x_ref[pl.ds(0, r1), :], band1_ref[0],
                  preferred_element_type=f32)
    for kh in range(1, K):
        acc = acc + jnp.dot(x_ref[pl.ds(kh, r1), :], band1_ref[kh],
                            preferred_element_type=f32)
    y1 = jnp.maximum(acc + bias1_ref[...], 0.0)                 # (r1, 28*6) f32

    # ---- pool1, W direction: lane pair-max + 0/1 selection matmul ---------
    c1 = 6
    mw1 = jnp.maximum(y1[:, :-c1], y1[:, c1:])                  # (r1, 27*6)
    mw1 = jnp.dot(mw1.astype(bf16), tw1_ref[...],
                  preferred_element_type=f32)                   # (r1, 14*6) f32
    s1_ref[pl.ds(0, r1), :] = mw1
    # Zero the 4 tail rows so the strided pool below never reads stale VMEM
    # (those rows only ever feed garbage outputs, but keep them defined).
    s1_ref[pl.ds(r1, K - 1), :] = jnp.zeros((K - 1, s1_ref.shape[1]), f32)

    # ---- pool1, H direction: global even/odd row pair-max (period 32 -> 16)
    a1 = jnp.maximum(s1_ref[pl.ds(0, R2, stride=2), :],
                     s1_ref[pl.ds(1, R2, stride=2), :])         # (tb*16, 84) f32
    s2_ref[...] = a1.astype(bf16)                               # staged for conv2

    # ---- conv2 + bias + relu ----------------------------------------------
    acc = jnp.dot(s2_ref[pl.ds(0, r2), :], band2_ref[0],
                  preferred_element_type=f32)
    for kh in range(1, K):
        acc = acc + jnp.dot(s2_ref[pl.ds(kh, r2), :], band2_ref[kh],
                            preferred_element_type=f32)
    y2 = jnp.maximum(acc + bias2_ref[...], 0.0)                 # (r2, 10*16) f32

    # ---- pool2, W direction ------------------------------------------------
    c2 = 16
    mw2 = jnp.maximum(y2[:, :-c2], y2[:, c2:])                  # (r2, 9*16)
    mw2 = jnp.dot(mw2.astype(bf16), tw2_ref[...],
                  preferred_element_type=f32)                   # (r2, 5*16) f32
    s3_ref[pl.ds(0, r2), :] = mw2

    # ---- pool2, H direction + per-image flatten via stride-16 row gathers --
    # Rows b*16 + 2*hp and b*16 + 2*hp + 1 of s3 hold the hp-th output-row
    # pair of image b; one stride-16 load gathers that hp across the tile.
    feats = []
    for hp in range(5):
        fh = jnp.maximum(s3_ref[pl.ds(2 * hp, tb, stride=16), :],
                         s3_ref[pl.ds(2 * hp + 1, tb, stride=16), :])
        feats.append(fh)                                        # (tb, 80) f32
    flat = jnp.concatenate(feats, axis=1)                       # (tb, 400) f32

    # ---- fc1 / fc2 / fc3 (single fused fc1 matmul, K=400) -------------------
    h1 = jnp.maximum(jnp.dot(flat.astype(bf16), w1s_ref[...],
                             preferred_element_type=f32) + bfc1_ref[...], 0.0)
    h2 = jnp.maximum(jnp.dot(h1.astype(bf16), w2t_ref[...],
                             preferred_element_type=f32) + bfc2_ref[...], 0.0)
    logits = (jnp.dot(h2.astype(bf16), w3t_ref[...],
                      preferred_element_type=f32) + bfc3_ref[...])
    out_ref[...] = logits.astype(out_ref.dtype)


def _choose_batch_tile(B):
    # Prefer big tiles (amortize per-step overhead, fill the MXU M dim) while
    # keeping >= 2 grid steps so both v7x TensorCores get work.
    for tb in (32, 16, 8):
        if B % tb == 0 and B // tb >= 2:
            return tb
    if B % 8 == 0:
        return 8
    return B          # small / odd batch: one whole-batch tile


def lenet_forward(prep, x, *, batch_tile=None):
    B = x.shape[0]
    assert x.shape[1:] == (3, 32, 32), x.shape
    tb = _choose_batch_tile(B) if batch_tile is None else batch_tile
    assert B % tb == 0, (B, tb)

    # Lane-dense bf16 slab: rows = (b, h), lanes = w*3 + c.
    x_rows = jnp.transpose(x, (0, 2, 3, 1)).reshape(B * 32, 32 * 3)
    x_rows = x_rows.astype(jnp.bfloat16)

    consts = (prep["band1"], prep["bias1"], prep["tw1"],
              prep["band2"], prep["bias2"], prep["tw2"],
              prep["w1s"], prep["bfc1"], prep["w2t"], prep["bfc2"],
              prep["w3t"], prep["bfc3"])

    def const_spec(a):
        n = a.ndim
        return pl.BlockSpec(a.shape, lambda i, _n=n: (0,) * _n)

    return pl.pallas_call(
        _lenet_kernel,
        out_shape=jax.ShapeDtypeStruct((B, 10), jnp.float32),
        grid=(B // tb,),
        in_specs=[pl.BlockSpec((tb * 32, 96), lambda i: (i, 0))]
                 + [const_spec(a) for a in consts],
        out_specs=pl.BlockSpec((tb, 10), lambda i: (i, 0)),
        scratch_shapes=[
            pltpu.VMEM((tb * 32, 84), jnp.float32),    # s1: W-pooled conv1
            pltpu.VMEM((tb * 16, 84), jnp.bfloat16),   # s2: pool1 output (a1)
            pltpu.VMEM((tb * 16, 80), jnp.float32),    # s3: W-pooled conv2
        ],
        compiler_params=pltpu.CompilerParams(
            dimension_semantics=("parallel",)),
    )(x_rows, *consts)


# ---------------------------------------------------------------------------
# Pure-JAX reference (numerical sanity check vs. the original module).
# ---------------------------------------------------------------------------
def net_forward_ref(params, x):
    def conv(x, w, b):
        y = jax.lax.conv_general_dilated(
            x, w, (1, 1), "VALID", dimension_numbers=("NCHW", "OIHW", "NCHW"))
        return jax.nn.relu(y + b[None, :, None, None])

    def pool(x):
        return jax.lax.reduce_window(
            x, -jnp.inf, jax.lax.max, (1, 1, 2, 2), (1, 1, 2, 2), "VALID")

    x = pool(conv(x, params["conv1_w"], params["conv1_b"]))
    x = pool(conv(x, params["conv2_w"], params["conv2_b"]))
    x = x.reshape(x.shape[0], -1)
    x = jax.nn.relu(x @ params["fc1_w"].T + params["fc1_b"])
    x = jax.nn.relu(x @ params["fc2_w"].T + params["fc2_b"])
    return x @ params["fc3_w"].T + params["fc3_b"]


if __name__ == "__main__":
    key = jax.random.PRNGKey(0)
    pkey, xkey = jax.random.split(key)
    params = init_params(pkey)
    x = jax.random.normal(xkey, (2, 3, 32, 32), jnp.float32)

    prep = prepare_params(params)
    fwd = jax.jit(lenet_forward)

    out = jax.block_until_ready(fwd(prep, x))
    assert out.shape == (x.shape[0], 10), out.shape

    ref = jax.block_until_ready(net_forward_ref(params, x))
    err = float(jnp.max(jnp.abs(out - ref)))
    # bf16 MXU operands (matching the TPU-default precision the f32 reference
    # itself uses) -> a ~1e-2-class tolerance.
    assert jnp.allclose(out, ref, rtol=2e-2, atol=2e-2), err

    print("KERNEL_OK")
</pallas_src>

<mosaic_0001>
module attributes {stable_mosaic.version = 11 : i64} {
  func.func @_lenet_kernel(%arg0: i32, %arg1: memref<64x96xbf16, #tpu.memory_space<vmem>>, %arg2: memref<5x96x168xbf16, #tpu.memory_space<vmem>>, %arg3: memref<1x168xf32, #tpu.memory_space<vmem>>, %arg4: memref<162x84xbf16, #tpu.memory_space<vmem>>, %arg5: memref<5x84x160xbf16, #tpu.memory_space<vmem>>, %arg6: memref<1x160xf32, #tpu.memory_space<vmem>>, %arg7: memref<144x80xbf16, #tpu.memory_space<vmem>>, %arg8: memref<400x120xbf16, #tpu.memory_space<vmem>>, %arg9: memref<1x120xf32, #tpu.memory_space<vmem>>, %arg10: memref<120x84xbf16, #tpu.memory_space<vmem>>, %arg11: memref<1x84xf32, #tpu.memory_space<vmem>>, %arg12: memref<84x10xbf16, #tpu.memory_space<vmem>>, %arg13: memref<1x10xf32, #tpu.memory_space<vmem>>, %arg14: memref<2x10xf32, #tpu.memory_space<vmem>>, %arg15: memref<64x84xf32, #tpu.memory_space<vmem>>, %arg16: memref<32x84xbf16, #tpu.memory_space<vmem>>, %arg17: memref<32x80xf32, #tpu.memory_space<vmem>>) attributes {dimension_semantics = [#tpu.dimension_semantics<parallel>], iteration_bounds = array<i64: 1>, scalar_prefetch = 0 : i64, scratch_operands = 3 : i64, tpu.core_type = #tpu.core_type<tc>, window_params = [{transform_indices = @transform_0, window_bounds = array<i64: 64, 96>}, {pipeline_mode = #tpu.pipeline_mode<synchronous>, transform_indices = @transform_1, window_bounds = array<i64: 5, 96, 168>}, {pipeline_mode = #tpu.pipeline_mode<synchronous>, transform_indices = @transform_2, window_bounds = array<i64: 1, 168>}, {pipeline_mode = #tpu.pipeline_mode<synchronous>, transform_indices = @transform_3, window_bounds = array<i64: 162, 84>}, {pipeline_mode = #tpu.pipeline_mode<synchronous>, transform_indices = @transform_4, window_bounds = array<i64: 5, 84, 160>}, {pipeline_mode = #tpu.pipeline_mode<synchronous>, transform_indices = @transform_5, window_bounds = array<i64: 1, 160>}, {pipeline_mode = #tpu.pipeline_mode<synchronous>, transform_indices = @transform_6, window_bounds = array<i64: 144, 80>}, {pipeline_mode = #tpu.pipeline_mode<synchronous>, transform_indices = @transform_7, window_bounds = array<i64: 400, 120>}, {pipeline_mode = #tpu.pipeline_mode<synchronous>, transform_indices = @transform_8, window_bounds = array<i64: 1, 120>}, {pipeline_mode = #tpu.pipeline_mode<synchronous>, transform_indices = @transform_9, window_bounds = array<i64: 120, 84>}, {pipeline_mode = #tpu.pipeline_mode<synchronous>, transform_indices = @transform_10, window_bounds = array<i64: 1, 84>}, {pipeline_mode = #tpu.pipeline_mode<synchronous>, transform_indices = @transform_11, window_bounds = array<i64: 84, 10>}, {pipeline_mode = #tpu.pipeline_mode<synchronous>, transform_indices = @transform_12, window_bounds = array<i64: 1, 10>}, {transform_indices = @transform_13, window_bounds = array<i64: 2, 10>}]} {
    %c0 = arith.constant 0 : index
    %c0_0 = arith.constant 0 : index
    %0 = vector.load %arg1[%c0, %c0_0] : memref<64x96xbf16, #tpu.memory_space<vmem>>, vector<60x96xbf16>
    %c0_1 = arith.constant 0 : index
    %c0_2 = arith.constant 0 : index
    %c0_3 = arith.constant 0 : index
    %1 = vector.load %arg2[%c0_1, %c0_2, %c0_3] : memref<5x96x168xbf16, #tpu.memory_space<vmem>>, vector<1x96x168xbf16>
    %2 = vector.shape_cast %1 : vector<1x96x168xbf16> to vector<96x168xbf16>
    %cst = arith.constant dense<0.000000e+00> : vector<60x168xf32>
    %3 = tpu.matmul %0, %2, %cst {dimension_numbers = #tpu.dot_dimension_numbers<[1], [0], [0], [1], [0, 0, 1, 1], [], []>} : vector<60x96xbf16>, vector<96x168xbf16>, vector<60x168xf32> -> vector<60x168xf32>
    %c1 = arith.constant 1 : index
    %c0_4 = arith.constant 0 : index
    %4 = vector.load %arg1[%c1, %c0_4] : memref<64x96xbf16, #tpu.memory_space<vmem>>, vector<60x96xbf16>
    %c1_5 = arith.constant 1 : index
    %c0_6 = arith.constant 0 : index
    %c0_7 = arith.constant 0 : index
    %5 = vector.load %arg2[%c1_5, %c0_6, %c0_7] : memref<5x96x168xbf16, #tpu.memory_space<vmem>>, vector<1x96x168xbf16>
    %6 = vector.shape_cast %5 : vector<1x96x168xbf16> to vector<96x168xbf16>
    %cst_8 = arith.constant dense<0.000000e+00> : vector<60x168xf32>
    %7 = tpu.matmul %4, %6, %cst_8 {dimension_numbers = #tpu.dot_dimension_numbers<[1], [0], [0], [1], [0, 0, 1, 1], [], []>} : vector<60x96xbf16>, vector<96x168xbf16>, vector<60x168xf32> -> vector<60x168xf32>
    %8 = arith.addf %3, %7 : vector<60x168xf32>
    %c2 = arith.constant 2 : index
    %c0_9 = arith.constant 0 : index
    %9 = vector.load %arg1[%c2, %c0_9] : memref<64x96xbf16, #tpu.memory_space<vmem>>, vector<60x96xbf16>
    %c2_10 = arith.constant 2 : index
    %c0_11 = arith.constant 0 : index
    %c0_12 = arith.constant 0 : index
    %10 = vector.load %arg2[%c2_10, %c0_11, %c0_12] : memref<5x96x168xbf16, #tpu.memory_space<vmem>>, vector<1x96x168xbf16>
    %11 = vector.shape_cast %10 : vector<1x96x168xbf16> to vector<96x168xbf16>
    %cst_13 = arith.constant dense<0.000000e+00> : vector<60x168xf32>
    %12 = tpu.matmul %9, %11, %cst_13 {dimension_numbers = #tpu.dot_dimension_numbers<[1], [0], [0], [1], [0, 0, 1, 1], [], []>} : vector<60x96xbf16>, vector<96x168xbf16>, vector<60x168xf32> -> vector<60x168xf32>
    %13 = arith.addf %8, %12 : vector<60x168xf32>
    %c3 = arith.constant 3 : index
    %c0_14 = arith.constant 0 : index
    %14 = vector.load %arg1[%c3, %c0_14] : memref<64x96xbf16, #tpu.memory_space<vmem>>, vector<60x96xbf16>
    %c3_15 = arith.constant 3 : index
    %c0_16 = arith.constant 0 : index
    %c0_17 = arith.constant 0 : index
    %15 = vector.load %arg2[%c3_15, %c0_16, %c0_17] : memref<5x96x168xbf16, #tpu.memory_space<vmem>>, vector<1x96x168xbf16>
    %16 = vector.shape_cast %15 : vector<1x96x168xbf16> to vector<96x168xbf16>
    %cst_18 = arith.constant dense<0.000000e+00> : vector<60x168xf32>
    %17 = tpu.matmul %14, %16, %cst_18 {dimension_numbers = #tpu.dot_dimension_numbers<[1], [0], [0], [1], [0, 0, 1, 1], [], []>} : vector<60x96xbf16>, vector<96x168xbf16>, vector<60x168xf32> -> vector<60x168xf32>
    %18 = arith.addf %13, %17 : vector<60x168xf32>
    %c4 = arith.constant 4 : index
    %c0_19 = arith.constant 0 : index
    %19 = vector.load %arg1[%c4, %c0_19] : memref<64x96xbf16, #tpu.memory_space<vmem>>, vector<60x96xbf16>
    %c4_20 = arith.constant 4 : index
    %c0_21 = arith.constant 0 : index
    %c0_22 = arith.constant 0 : index
    %20 = vector.load %arg2[%c4_20, %c0_21, %c0_22] : memref<5x96x168xbf16, #tpu.memory_space<vmem>>, vector<1x96x168xbf16>
    %21 = vector.shape_cast %20 : vector<1x96x168xbf16> to vector<96x168xbf16>
    %cst_23 = arith.constant dense<0.000000e+00> : vector<60x168xf32>
    %22 = tpu.matmul %19, %21, %cst_23 {dimension_numbers = #tpu.dot_dimension_numbers<[1], [0], [0], [1], [0, 0, 1, 1], [], []>} : vector<60x96xbf16>, vector<96x168xbf16>, vector<60x168xf32> -> vector<60x168xf32>
    %23 = arith.addf %18, %22 : vector<60x168xf32>
    %c0_24 = arith.constant 0 : index
    %c0_25 = arith.constant 0 : index
    %24 = vector.load %arg3[%c0_24, %c0_25] : memref<1x168xf32, #tpu.memory_space<vmem>>, vector<1x168xf32>
    %25 = vector.broadcast %24 : vector<1x168xf32> to vector<60x168xf32>
    %26 = arith.addf %23, %25 : vector<60x168xf32>
    %cst_26 = arith.constant 0.000000e+00 : f32
    %27 = vector.broadcast %cst_26 : f32 to vector<60x168xf32>
    %28 = arith.maximumf %26, %27 : vector<60x168xf32>
    %29 = vector.extract_strided_slice %28 {offsets = [0, 0], sizes = [60, 162], strides = [1, 1]} : vector<60x168xf32> to vector<60x162xf32>
    %30 = vector.extract_strided_slice %28 {offsets = [0, 6], sizes = [60, 162], strides = [1, 1]} : vector<60x168xf32> to vector<60x162xf32>
    %31 = arith.maximumf %29, %30 : vector<60x162xf32>
    %32 = arith.truncf %31 : vector<60x162xf32> to vector<60x162xbf16>
    %c0_27 = arith.constant 0 : index
    %c0_28 = arith.constant 0 : index
    %33 = vector.load %arg4[%c0_27, %c0_28] : memref<162x84xbf16, #tpu.memory_space<vmem>>, vector<162x84xbf16>
    %cst_29 = arith.constant dense<0.000000e+00> : vector<60x84xf32>
    %34 = tpu.matmul %32, %33, %cst_29 {dimension_numbers = #tpu.dot_dimension_numbers<[1], [0], [0], [1], [0, 0, 1, 1], [], []>} : vector<60x162xbf16>, vector<162x84xbf16>, vector<60x84xf32> -> vector<60x84xf32>
    %c0_30 = arith.constant 0 : index
    %c0_31 = arith.constant 0 : index
    %35 = vector.load %arg15[%c0_30, %c0_31] : memref<64x84xf32, #tpu.memory_space<vmem>>, vector<60x84xf32>
    tpu.vector_store %arg15[%c0_30, %c0_31], %34 {strides = array<i32>} : memref<64x84xf32, #tpu.memory_space<vmem>>, vector<60x84xf32>,
    %cst_32 = arith.constant 0.000000e+00 : f32
    %36 = vector.broadcast %cst_32 : f32 to vector<4x84xf32>
    %c60 = arith.constant 60 : index
    %c0_33 = arith.constant 0 : index
    %37 = vector.load %arg15[%c60, %c0_33] : memref<64x84xf32, #tpu.memory_space<vmem>>, vector<4x84xf32>
    tpu.vector_store %arg15[%c60, %c0_33], %36 {strides = array<i32>} : memref<64x84xf32, #tpu.memory_space<vmem>>, vector<4x84xf32>,
    %c0_34 = arith.constant 0 : index
    %c0_35 = arith.constant 0 : index
    %38 = tpu.strided_load %arg15[%c0_34, %c0_35] {strides = array<i32: 2, 1>} : memref<64x84xf32, #tpu.memory_space<vmem>>, vector<32x84xf32>
    %c1_36 = arith.constant 1 : index
    %c0_37 = arith.constant 0 : index
    %39 = tpu.strided_load %arg15[%c1_36, %c0_37] {strides = array<i32: 2, 1>} : memref<64x84xf32, #tpu.memory_space<vmem>>, vector<32x84xf32>
    %40 = arith.maximumf %38, %39 : vector<32x84xf32>
    %41 = arith.truncf %40 : vector<32x84xf32> to vector<32x84xbf16>
    %c0_38 = arith.constant 0 : index
    %c0_39 = arith.constant 0 : index
    %42 = vector.load %arg16[%c0_38, %c0_39] : memref<32x84xbf16, #tpu.memory_space<vmem>>, vector<32x84xbf16>
    tpu.vector_store %arg16[%c0_38, %c0_39], %41 {strides = array<i32>} : memref<32x84xbf16, #tpu.memory_space<vmem>>, vector<32x84xbf16>,
    %c0_40 = arith.constant 0 : index
    %c0_41 = arith.constant 0 : index
    %43 = vector.load %arg16[%c0_40, %c0_41] : memref<32x84xbf16, #tpu.memory_space<vmem>>, vector<28x84xbf16>
    %c0_42 = arith.constant 0 : index
    %c0_43 = arith.constant 0 : index
    %c0_44 = arith.constant 0 : index
    %44 = vector.load %arg5[%c0_42, %c0_43, %c0_44] : memref<5x84x160xbf16, #tpu.memory_space<vmem>>, vector<1x84x160xbf16>
    %45 = vector.shape_cast %44 : vector<1x84x160xbf16> to vector<84x160xbf16>
    %cst_45 = arith.constant dense<0.000000e+00> : vector<28x160xf32>
    %46 = tpu.matmul %43, %45, %cst_45 {dimension_numbers = #tpu.dot_dimension_numbers<[1], [0], [0], [1], [0, 0, 1, 1], [], []>} : vector<28x84xbf16>, vector<84x160xbf16>, vector<28x160xf32> -> vector<28x160xf32>
    %c1_46 = arith.constant 1 : index
    %c0_47 = arith.constant 0 : index
    %47 = vector.load %arg16[%c1_46, %c0_47] : memref<32x84xbf16, #tpu.memory_space<vmem>>, vector<28x84xbf16>
    %c1_48 = arith.constant 1 : index
    %c0_49 = arith.constant 0 : index
    %c0_50 = arith.constant 0 : index
    %48 = vector.load %arg5[%c1_48, %c0_49, %c0_50] : memref<5x84x160xbf16, #tpu.memory_space<vmem>>, vector<1x84x160xbf16>
    %49 = vector.shape_cast %48 : vector<1x84x160xbf16> to vector<84x160xbf16>
    %cst_51 = arith.constant dense<0.000000e+00> : vector<28x160xf32>
    %50 = tpu.matmul %47, %49, %cst_51 {dimension_numbers = #tpu.dot_dimension_numbers<[1], [0], [0], [1], [0, 0, 1, 1], [], []>} : vector<28x84xbf16>, vector<84x160xbf16>, vector<28x160xf32> -> vector<28x160xf32>
    %51 = arith.addf %46, %50 : vector<28x160xf32>
    %c2_52 = arith.constant 2 : index
    %c0_53 = arith.constant 0 : index
    %52 = vector.load %arg16[%c2_52, %c0_53] : memref<32x84xbf16, #tpu.memory_space<vmem>>, vector<28x84xbf16>
    %c2_54 = arith.constant 2 : index
    %c0_55 = arith.constant 0 : index
    %c0_56 = arith.constant 0 : index
    %53 = vector.load %arg5[%c2_54, %c0_55, %c0_56] : memref<5x84x160xbf16, #tpu.memory_space<vmem>>, vector<1x84x160xbf16>
    %54 = vector.shape_cast %53 : vector<1x84x160xbf16> to vector<84x160xbf16>
    %cst_57 = arith.constant dense<0.000000e+00> : vector<28x160xf32>
    %55 = tpu.matmul %52, %54, %cst_57 {dimension_numbers = #tpu.dot_dimension_numbers<[1], [0], [0], [1], [0, 0, 1, 1], [], []>} : vector<28x84xbf16>, vector<84x160xbf16>, vector<28x160xf32> -> vector<28x160xf32>
    %56 = arith.addf %51, %55 : vector<28x160xf32>
    %c3_58 = arith.constant 3 : index
    %c0_59 = arith.constant 0 : index
    %57 = vector.load %arg16[%c3_58, %c0_59] : memref<32x84xbf16, #tpu.memory_space<vmem>>, vector<28x84xbf16>
    %c3_60 = arith.constant 3 : index
    %c0_61 = arith.constant 0 : index
    %c0_62 = arith.constant 0 : index
    %58 = vector.load %arg5[%c3_60, %c0_61, %c0_62] : memref<5x84x160xbf16, #tpu.memory_space<vmem>>, vector<1x84x160xbf16>
    %59 = vector.shape_cast %58 : vector<1x84x160xbf16> to vector<84x160xbf16>
    %cst_63 = arith.constant dense<0.000000e+00> : vector<28x160xf32>
    %60 = tpu.matmul %57, %59, %cst_63 {dimension_numbers = #tpu.dot_dimension_numbers<[1], [0], [0], [1], [0, 0, 1, 1], [], []>} : vector<28x84xbf16>, vector<84x160xbf16>, vector<28x160xf32> -> vector<28x160xf32>
    %61 = arith.addf %56, %60 : vector<28x160xf32>
    %c4_64 = arith.constant 4 : index
    %c0_65 = arith.constant 0 : index
    %62 = vector.load %arg16[%c4_64, %c0_65] : memref<32x84xbf16, #tpu.memory_space<vmem>>, vector<28x84xbf16>
    %c4_66 = arith.constant 4 : index
    %c0_67 = arith.constant 0 : index
    %c0_68 = arith.constant 0 : index
    %63 = vector.load %arg5[%c4_66, %c0_67, %c0_68] : memref<5x84x160xbf16, #tpu.memory_space<vmem>>, vector<1x84x160xbf16>
    %64 = vector.shape_cast %63 : vector<1x84x160xbf16> to vector<84x160xbf16>
    %cst_69 = arith.constant dense<0.000000e+00> : vector<28x160xf32>
    %65 = tpu.matmul %62, %64, %cst_69 {dimension_numbers = #tpu.dot_dimension_numbers<[1], [0], [0], [1], [0, 0, 1, 1], [], []>} : vector<28x84xbf16>, vector<84x160xbf16>, vector<28x160xf32> -> vector<28x160xf32>
    %66 = arith.addf %61, %65 : vector<28x160xf32>
    %c0_70 = arith.constant 0 : index
    %c0_71 = arith.constant 0 : index
    %67 = vector.load %arg6[%c0_70, %c0_71] : memref<1x160xf32, #tpu.memory_space<vmem>>, vector<1x160xf32>
    %68 = vector.broadcast %67 : vector<1x160xf32> to vector<28x160xf32>
    %69 = arith.addf %66, %68 : vector<28x160xf32>
    %cst_72 = arith.constant 0.000000e+00 : f32
    %70 = vector.broadcast %cst_72 : f32 to vector<28x160xf32>
    %71 = arith.maximumf %69, %70 : vector<28x160xf32>
    %72 = vector.extract_strided_slice %71 {offsets = [0, 0], sizes = [28, 144], strides = [1, 1]} : vector<28x160xf32> to vector<28x144xf32>
    %73 = vector.extract_strided_slice %71 {offsets = [0, 16], sizes = [28, 144], strides = [1, 1]} : vector<28x160xf32> to vector<28x144xf32>
    %74 = arith.maximumf %72, %73 : vector<28x144xf32>
    %75 = arith.truncf %74 : vector<28x144xf32> to vector<28x144xbf16>
    %c0_73 = arith.constant 0 : index
    %c0_74 = arith.constant 0 : index
    %76 = vector.load %arg7[%c0_73, %c0_74] : memref<144x80xbf16, #tpu.memory_space<vmem>>, vector<144x80xbf16>
    %cst_75 = arith.constant dense<0.000000e+00> : vector<28x80xf32>
    %77 = tpu.matmul %75, %76, %cst_75 {dimension_numbers = #tpu.dot_dimension_numbers<[1], [0], [0], [1], [0, 0, 1, 1], [], []>} : vector<28x144xbf16>, vector<144x80xbf16>, vector<28x80xf32> -> vector<28x80xf32>
    %c0_76 = arith.constant 0 : index
    %c0_77 = arith.constant 0 : index
    %78 = vector.load %arg17[%c0_76, %c0_77] : memref<32x80xf32, #tpu.memory_space<vmem>>, vector<28x80xf32>
    tpu.vector_store %arg17[%c0_76, %c0_77], %77 {strides = array<i32>} : memref<32x80xf32, #tpu.memory_space<vmem>>, vector<28x80xf32>,
    %c0_78 = arith.constant 0 : index
    %c0_79 = arith.constant 0 : index
    %79 = tpu.strided_load %arg17[%c0_78, %c0_79] {strides = array<i32: 16, 1>} : memref<32x80xf32, #tpu.memory_space<vmem>>, vector<2x80xf32>
    %c1_80 = arith.constant 1 : index
    %c0_81 = arith.constant 0 : index
    %80 = tpu.strided_load %arg17[%c1_80, %c0_81] {strides = array<i32: 16, 1>} : memref<32x80xf32, #tpu.memory_space<vmem>>, vector<2x80xf32>
    %81 = arith.maximumf %79, %80 : vector<2x80xf32>
    %c2_82 = arith.constant 2 : index
    %c0_83 = arith.constant 0 : index
    %82 = tpu.strided_load %arg17[%c2_82, %c0_83] {strides = array<i32: 16, 1>} : memref<32x80xf32, #tpu.memory_space<vmem>>, vector<2x80xf32>
    %c3_84 = arith.constant 3 : index
    %c0_85 = arith.constant 0 : index
    %83 = tpu.strided_load %arg17[%c3_84, %c0_85] {strides = array<i32: 16, 1>} : memref<32x80xf32, #tpu.memory_space<vmem>>, vector<2x80xf32>
    %84 = arith.maximumf %82, %83 : vector<2x80xf32>
    %c4_86 = arith.constant 4 : index
    %c0_87 = arith.constant 0 : index
    %85 = tpu.strided_load %arg17[%c4_86, %c0_87] {strides = array<i32: 16, 1>} : memref<32x80xf32, #tpu.memory_space<vmem>>, vector<2x80xf32>
    %c5 = arith.constant 5 : index
    %c0_88 = arith.constant 0 : index
    %86 = tpu.strided_load %arg17[%c5, %c0_88] {strides = array<i32: 16, 1>} : memref<32x80xf32, #tpu.memory_space<vmem>>, vector<2x80xf32>
    %87 = arith.maximumf %85, %86 : vector<2x80xf32>
    %c6 = arith.constant 6 : index
    %c0_89 = arith.constant 0 : index
    %88 = tpu.strided_load %arg17[%c6, %c0_89] {strides = array<i32: 16, 1>} : memref<32x80xf32, #tpu.memory_space<vmem>>, vector<2x80xf32>
    %c7 = arith.constant 7 : index
    %c0_90 = arith.constant 0 : index
    %89 = tpu.strided_load %arg17[%c7, %c0_90] {strides = array<i32: 16, 1>} : memref<32x80xf32, #tpu.memory_space<vmem>>, vector<2x80xf32>
    %90 = arith.maximumf %88, %89 : vector<2x80xf32>
    %c8 = arith.constant 8 : index
    %c0_91 = arith.constant 0 : index
    %91 = tpu.strided_load %arg17[%c8, %c0_91] {strides = array<i32: 16, 1>} : memref<32x80xf32, #tpu.memory_space<vmem>>, vector<2x80xf32>
    %c9 = arith.constant 9 : index
    %c0_92 = arith.constant 0 : index
    %92 = tpu.strided_load %arg17[%c9, %c0_92] {strides = array<i32: 16, 1>} : memref<32x80xf32, #tpu.memory_space<vmem>>, vector<2x80xf32>
    %93 = arith.maximumf %91, %92 : vector<2x80xf32>
    %94 = tpu.concatenate %81, %84, %87, %90, %93 in 1 : vector<2x80xf32>, vector<2x80xf32>, vector<2x80xf32>, vector<2x80xf32>, vector<2x80xf32> -> vector<2x400xf32>
    %95 = arith.truncf %94 : vector<2x400xf32> to vector<2x400xbf16>
    %c0_93 = arith.constant 0 : index
    %c0_94 = arith.constant 0 : index
    %96 = vector.load %arg8[%c0_93, %c0_94] : memref<400x120xbf16, #tpu.memory_space<vmem>>, vector<400x120xbf16>
    %cst_95 = arith.constant dense<0.000000e+00> : vector<2x120xf32>
    %97 = tpu.matmul %95, %96, %cst_95 {dimension_numbers = #tpu.dot_dimension_numbers<[1], [0], [0], [1], [0, 0, 1, 1], [], []>} : vector<2x400xbf16>, vector<400x120xbf16>, vector<2x120xf32> -> vector<2x120xf32>
    %c0_96 = arith.constant 0 : index
    %c0_97 = arith.constant 0 : index
    %98 = vector.load %arg9[%c0_96, %c0_97] : memref<1x120xf32, #tpu.memory_space<vmem>>, vector<1x120xf32>
    %99 = vector.broadcast %98 : vector<1x120xf32> to vector<2x120xf32>
    %100 = arith.addf %97, %99 : vector<2x120xf32>
    %cst_98 = arith.constant 0.000000e+00 : f32
    %101 = vector.broadcast %cst_98 : f32 to vector<2x120xf32>
    %102 = arith.maximumf %100, %101 : vector<2x120xf32>
    %103 = arith.truncf %102 : vector<2x120xf32> to vector<2x120xbf16>
    %c0_99 = arith.constant 0 : index
    %c0_100 = arith.constant 0 : index
    %104 = vector.load %arg10[%c0_99, %c0_100] : memref<120x84xbf16, #tpu.memory_space<vmem>>, vector<120x84xbf16>
    %cst_101 = arith.constant dense<0.000000e+00> : vector<2x84xf32>
    %105 = tpu.matmul %103, %104, %cst_101 {dimension_numbers = #tpu.dot_dimension_numbers<[1], [0], [0], [1], [0, 0, 1, 1], [], []>} : vector<2x120xbf16>, vector<120x84xbf16>, vector<2x84xf32> -> vector<2x84xf32>
    %c0_102 = arith.constant 0 : index
    %c0_103 = arith.constant 0 : index
    %106 = vector.load %arg11[%c0_102, %c0_103] : memref<1x84xf32, #tpu.memory_space<vmem>>, vector<1x84xf32>
    %107 = vector.broadcast %106 : vector<1x84xf32> to vector<2x84xf32>
    %108 = arith.addf %105, %107 : vector<2x84xf32>
    %cst_104 = arith.constant 0.000000e+00 : f32
    %109 = vector.broadcast %cst_104 : f32 to vector<2x84xf32>
    %110 = arith.maximumf %108, %109 : vector<2x84xf32>
    %111 = arith.truncf %110 : vector<2x84xf32> to vector<2x84xbf16>
    %c0_105 = arith.constant 0 : index
    %c0_106 = arith.constant 0 : index
    %112 = vector.load %arg12[%c0_105, %c0_106] : memref<84x10xbf16, #tpu.memory_space<vmem>>, vector<84x10xbf16>
    %cst_107 = arith.constant dense<0.000000e+00> : vector<2x10xf32>
    %113 = tpu.matmul %111, %112, %cst_107 {dimension_numbers = #tpu.dot_dimension_numbers<[1], [0], [0], [1], [0, 0, 1, 1], [], []>} : vector<2x84xbf16>, vector<84x10xbf16>, vector<2x10xf32> -> vector<2x10xf32>
    %c0_108 = arith.constant 0 : index
    %c0_109 = arith.constant 0 : index
    %114 = vector.load %arg13[%c0_108, %c0_109] : memref<1x10xf32, #tpu.memory_space<vmem>>, vector<1x10xf32>
    %115 = vector.broadcast %114 : vector<1x10xf32> to vector<2x10xf32>
    %116 = arith.addf %113, %115 : vector<2x10xf32>
    %c0_110 = arith.constant 0 : index
    %c0_111 = arith.constant 0 : index
    %117 = vector.load %arg14[%c0_110, %c0_111] : memref<2x10xf32, #tpu.memory_space<vmem>>, vector<2x10xf32>
    tpu.vector_store %arg14[%c0_110, %c0_111], %116 {strides = array<i32>} : memref<2x10xf32, #tpu.memory_space<vmem>>, vector<2x10xf32>,
    return
  }
  func.func @transform_0(%arg0: i32) -> (i32, i32) {
    %c0_i32 = arith.constant 0 : i32
    %c0_i32_0 = arith.constant 0 : i32
    return %arg0, %c0_i32 : i32, i32
  }
  func.func @transform_1(%arg0: i32) -> (i32, i32, i32) {
    %c0_i32 = arith.constant 0 : i32
    %c0_i32_0 = arith.constant 0 : i32
    %c0_i32_1 = arith.constant 0 : i32
    %c0_i32_2 = arith.constant 0 : i32
    return %c0_i32, %c0_i32_0, %c0_i32_1 : i32, i32, i32
  }
  func.func @transform_2(%arg0: i32) -> (i32, i32) {
    %c0_i32 = arith.constant 0 : i32
    %c0_i32_0 = arith.constant 0 : i32
    %c0_i32_1 = arith.constant 0 : i32
    return %c0_i32, %c0_i32_0 : i32, i32
  }
  func.func @transform_3(%arg0: i32) -> (i32, i32) {
    %c0_i32 = arith.constant 0 : i32
    %c0_i32_0 = arith.constant 0 : i32
    %c0_i32_1 = arith.constant 0 : i32
    return %c0_i32, %c0_i32_0 : i32, i32
  }
  func.func @transform_4(%arg0: i32) -> (i32, i32, i32) {
    %c0_i32 = arith.constant 0 : i32
    %c0_i32_0 = arith.constant 0 : i32
    %c0_i32_1 = arith.constant 0 : i32
    %c0_i32_2 = arith.constant 0 : i32
    return %c0_i32, %c0_i32_0, %c0_i32_1 : i32, i32, i32
  }
  func.func @transform_5(%arg0: i32) -> (i32, i32) {
    %c0_i32 = arith.constant 0 : i32
    %c0_i32_0 = arith.constant 0 : i32
    %c0_i32_1 = arith.constant 0 : i32
    return %c0_i32, %c0_i32_0 : i32, i32
  }
  func.func @transform_6(%arg0: i32) -> (i32, i32) {
    %c0_i32 = arith.constant 0 : i32
    %c0_i32_0 = arith.constant 0 : i32
    %c0_i32_1 = arith.constant 0 : i32
    return %c0_i32, %c0_i32_0 : i32, i32
  }
  func.func @transform_7(%arg0: i32) -> (i32, i32) {
    %c0_i32 = arith.constant 0 : i32
    %c0_i32_0 = arith.constant 0 : i32
    %c0_i32_1 = arith.constant 0 : i32
    return %c0_i32, %c0_i32_0 : i32, i32
  }
  func.func @transform_8(%arg0: i32) -> (i32, i32) {
    %c0_i32 = arith.constant 0 : i32
    %c0_i32_0 = arith.constant 0 : i32
    %c0_i32_1 = arith.constant 0 : i32
    return %c0_i32, %c0_i32_0 : i32, i32
  }
  func.func @transform_9(%arg0: i32) -> (i32, i32) {
    %c0_i32 = arith.constant 0 : i32
    %c0_i32_0 = arith.constant 0 : i32
    %c0_i32_1 = arith.constant 0 : i32
    return %c0_i32, %c0_i32_0 : i32, i32
  }
  func.func @transform_10(%arg0: i32) -> (i32, i32) {
    %c0_i32 = arith.constant 0 : i32
    %c0_i32_0 = arith.constant 0 : i32
    %c0_i32_1 = arith.constant 0 : i32
    return %c0_i32, %c0_i32_0 : i32, i32
  }
  func.func @transform_11(%arg0: i32) -> (i32, i32) {
    %c0_i32 = arith.constant 0 : i32
    %c0_i32_0 = arith.constant 0 : i32
    %c0_i32_1 = arith.constant 0 : i32
    return %c0_i32, %c0_i32_0 : i32, i32
  }
  func.func @transform_12(%arg0: i32) -> (i32, i32) {
    %c0_i32 = arith.constant 0 : i32
    %c0_i32_0 = arith.constant 0 : i32
    %c0_i32_1 = arith.constant 0 : i32
    return %c0_i32, %c0_i32_0 : i32, i32
  }
  func.func @transform_13(%arg0: i32) -> (i32, i32) {
    %c0_i32 = arith.constant 0 : i32
    %c0_i32_0 = arith.constant 0 : i32
    return %arg0, %c0_i32 : i32, i32
  }
}

</mosaic_0001>

<llo_original>
// kernel: lenet_forward.1
$region0: #{lenet_forward.1}
  #allocation0 [shape = 'u32[]', space=smem, size = 0x4, offset = 0x4, fixed_abs, tag = 'smem constant byte address 0x4 - core index']
  #allocation1 [shape = 'u32[144,128]{1,0:T(1,128)}', space=vmem, size = 0x12000, scoped, tag = 'internal scratch']
  #allocation2 [shape = 'f32[64,84]{1,0:T(8,128)}', space=vmem, size = 0x8000, scoped, tag = 'scratch operand']
  #allocation3 [shape = 'bf16[32,84]{1,0:T(8,128)(2,1)}', space=vmem, size = 0x2000, scoped, tag = 'scratch operand']
  #allocation4 [shape = 'f32[32,80]{1,0:T(8,128)}', space=vmem, size = 0x4000, scoped, tag = 'scratch operand']
  %s0 = inlined_call_operand.vmem [shape: bf16[64,96], index: 0, kind: input, shape index: {}]
  %s1 = inlined_call_operand.vmem [shape: bf16[5,96,168], index: 1, kind: input, shape index: {}]
  %s2 = inlined_call_operand.vmem [shape: f32[1,168], index: 2, kind: input, shape index: {}]
  %s3 = inlined_call_operand.vmem [shape: bf16[162,84], index: 3, kind: input, shape index: {}]
  %s4 = inlined_call_operand.vmem [shape: bf16[5,84,160], index: 4, kind: input, shape index: {}]
  %s5 = inlined_call_operand.vmem [shape: f32[1,160], index: 5, kind: input, shape index: {}]
  %s6 = inlined_call_operand.vmem [shape: bf16[144,80], index: 6, kind: input, shape index: {}]
  %s7 = inlined_call_operand.vmem [shape: bf16[400,120], index: 7, kind: input, shape index: {}]
  %s8 = inlined_call_operand.vmem [shape: f32[1,120], index: 8, kind: input, shape index: {}]
  %s9 = inlined_call_operand.vmem [shape: bf16[120,84], index: 9, kind: input, shape index: {}]
  %s10 = inlined_call_operand.vmem [shape: f32[1,84], index: 10, kind: input, shape index: {}]
  %s11 = inlined_call_operand.vmem [shape: bf16[84,10], index: 11, kind: input, shape index: {}]
  %s12 = inlined_call_operand.vmem [shape: f32[1,10], index: 12, kind: input, shape index: {}]
  %s13 = inlined_call_operand.hbm [shape: f32[2,10], index: 13, kind: output, shape index: {}]
  %s14 = sld [smem:[#allocation0]]
  $region62: #{lenet_forward.1} parent=0
    _
  %s16 = ssub.s32 1, %s14
  %s17 = scalar_select 0, %s16, %s14
  $region1: #{lenet_forward.1} parent=0
    #allocation5 [shape = 'u8[1024]{0}', space=vmem, size = 0x400, scoped, tag = 'output window, operand 0, single buffered']
    #allocation6 [shape = 's32[1]{0}', space=sflag, size = 0x4, scoped, tag = 'scoped memory for lenet_forward.1']
    %18 = vsyncpa [#allocation6], 0
    // Predicated region
    $region2: #{lenet_forward.1} parent=1 // pred_check
      _
    $region3: #{lenet_forward.1} parent=1 // pred_check_branch
      %20 = sbr.rel (0) target = $region5
    $region4: #{lenet_forward.1} parent=1 // pred_region
      _
    $region5: #{lenet_forward.1} parent=1 // pred_fallthru
      _
    // Predicated region
    $region6: #{lenet_forward.1} parent=1 // pred_check
      _
    $region7: #{lenet_forward.1} parent=1 // pred_check_branch
      %22 = sbr.rel (0) target = $region9
    $region8: #{lenet_forward.1} parent=1 // pred_region
      _
    $region9: #{lenet_forward.1} parent=1 // pred_fallthru
      _
    // Predicated region
    $region10: #{lenet_forward.1} parent=1 // pred_check
      _
    $region11: #{lenet_forward.1} parent=1 // pred_check_branch
      %24 = sbr.rel (0) target = $region13
    $region12: #{lenet_forward.1} parent=1 // pred_region
      _
    $region13: #{lenet_forward.1} parent=1 // pred_fallthru
      _
    // Predicated region
    $region14: #{lenet_forward.1} parent=1 // pred_check
      _
    $region15: #{lenet_forward.1} parent=1 // pred_check_branch
      %26 = sbr.rel (0) target = $region17
    $region16: #{lenet_forward.1} parent=1 // pred_region
      _
    $region17: #{lenet_forward.1} parent=1 // pred_fallthru
      _
    // Predicated region
    $region18: #{lenet_forward.1} parent=1 // pred_check
      _
    $region19: #{lenet_forward.1} parent=1 // pred_check_branch
      %28 = sbr.rel (0) target = $region21
    $region20: #{lenet_forward.1} parent=1 // pred_region
      _
    $region21: #{lenet_forward.1} parent=1 // pred_fallthru
      _
    // Predicated region
    $region22: #{lenet_forward.1} parent=1 // pred_check
      _
    $region23: #{lenet_forward.1} parent=1 // pred_check_branch
      %30 = sbr.rel (0) target = $region25
    $region24: #{lenet_forward.1} parent=1 // pred_region
      _
    $region25: #{lenet_forward.1} parent=1 // pred_fallthru
      _
    // Predicated region
    $region26: #{lenet_forward.1} parent=1 // pred_check
      _
    $region27: #{lenet_forward.1} parent=1 // pred_check_branch
      %32 = sbr.rel (0) target = $region29
    $region28: #{lenet_forward.1} parent=1 // pred_region
      _
    $region29: #{lenet_forward.1} parent=1 // pred_fallthru
      _
    // Predicated region
    $region30: #{lenet_forward.1} parent=1 // pred_check
      _
    $region31: #{lenet_forward.1} parent=1 // pred_check_branch
      %34 = sbr.rel (0) target = $region33
    $region32: #{lenet_forward.1} parent=1 // pred_region
      _
    $region33: #{lenet_forward.1} parent=1 // pred_fallthru
      _
    // Predicated region
    $region34: #{lenet_forward.1} parent=1 // pred_check
      _
    $region35: #{lenet_forward.1} parent=1 // pred_check_branch
      %36 = sbr.rel (0) target = $region37
    $region36: #{lenet_forward.1} parent=1 // pred_region
      _
    $region37: #{lenet_forward.1} parent=1 // pred_fallthru
      _
    // Predicated region
    $region38: #{lenet_forward.1} parent=1 // pred_check
      _
    $region39: #{lenet_forward.1} parent=1 // pred_check_branch
      %38 = sbr.rel (0) target = $region41
    $region40: #{lenet_forward.1} parent=1 // pred_region
      _
    $region41: #{lenet_forward.1} parent=1 // pred_fallthru
      _
    // Predicated region
    $region42: #{lenet_forward.1} parent=1 // pred_check
      _
    $region43: #{lenet_forward.1} parent=1 // pred_check_branch
      %40 = sbr.rel (0) target = $region45
    $region44: #{lenet_forward.1} parent=1 // pred_region
      _
    $region45: #{lenet_forward.1} parent=1 // pred_fallthru
      _
    // Predicated region
    $region46: #{lenet_forward.1} parent=1 // pred_check
      _
    $region47: #{lenet_forward.1} parent=1 // pred_check_branch
      %42 = sbr.rel (0) target = $region49
    $region48: #{lenet_forward.1} parent=1 // pred_region
      _
    $region49: #{lenet_forward.1} parent=1 // pred_fallthru
      _
    // Predicated region
    $region50: #{lenet_forward.1} parent=1 // pred_check
      _
    $region51: #{lenet_forward.1} parent=1 // pred_check_branch
      %44 = sbr.rel (0) target = $region53
    $region52: #{lenet_forward.1} parent=1 // pred_region
      _
    $region53: #{lenet_forward.1} parent=1 // pred_fallthru
      _
    %v46 = vld [vmem:[%s0] sm:$0xf]
    %v47 = vld [vmem:[%s0 + $0x4] sm:$0xf]
    %v48 = vld [vmem:[%s0 + $0x8] sm:$0xf]
    %v49 = vld [vmem:[%s0 + $0xc] sm:$0xf]
    %v50 = vld [vmem:[%s0 + $0x10] sm:$0xf]
    %v51 = vld [vmem:[%s0 + $0x14] sm:$0xf]
    %v52 = vld [vmem:[%s0 + $0x18] sm:$0xf]
    %v53 = vld [vmem:[%s0 + $0x1c] sm:$0x3]
    %v54 = vld [vmem:[%s1] sm:$0xff]
    %v55 = vld [vmem:[%s1 + $0x8] sm:$0xff]
    %v56 = vld [vmem:[%s1 + $0x10] sm:$0xff]
    %v57 = vld [vmem:[%s1 + $0x18] sm:$0xff]
    %v58 = vld [vmem:[%s1 + $0x20] sm:$0xff]
    %v59 = vld [vmem:[%s1 + $0x28] sm:$0xff]
    %v60 = vld [vmem:[%s1 + $0x30] sm:$0xff]
    %v61 = vld [vmem:[%s1 + $0x38] sm:$0xff]
    %v62 = vld [vmem:[%s1 + $0x40] sm:$0xff]
    %v63 = vld [vmem:[%s1 + $0x48] sm:$0xff]
    %v64 = vld [vmem:[%s1 + $0x50] sm:$0xff]
    %v65 = vld [vmem:[%s1 + $0x58] sm:$0xff]
    %v66 = vld [vmem:[%s0 + $0x1c] sm:$0x7]
    %s67 = scalar_lea.vmem %s1, 96
    %v68 = vld [vmem:[%s67] sm:$0xff]
    %v69 = vld [vmem:[%s67 + $0x8] sm:$0xff]
    %v70 = vld [vmem:[%s67 + $0x10] sm:$0xff]
    %v71 = vld [vmem:[%s67 + $0x18] sm:$0xff]
    %v72 = vld [vmem:[%s67 + $0x20] sm:$0xff]
    %v73 = vld [vmem:[%s67 + $0x28] sm:$0xff]
    %v74 = vld [vmem:[%s67 + $0x30] sm:$0xff]
    %v75 = vld [vmem:[%s67 + $0x38] sm:$0xff]
    %v76 = vld [vmem:[%s67 + $0x40] sm:$0xff]
    %v77 = vld [vmem:[%s67 + $0x48] sm:$0xff]
    %v78 = vld [vmem:[%s67 + $0x50] sm:$0xff]
    %v79 = vld [vmem:[%s67 + $0x58] sm:$0xff]
    %v88 = vunpack.c.l.b16 %v46
    %v89 = vunpack.c.l.b16 %v47
    %v90 = vunpack.c.l.b16 %v48
    %v91 = vunpack.c.l.b16 %v49
    %v92 = vunpack.c.l.b16 %v50
    %v93 = vunpack.c.l.b16 %v51
    %v94 = vunpack.c.l.b16 %v52
    %v95 = vunpack.c.l.b16 %v66
    %v96 = vpack.c.b16 %v89, %v88
    %v97 = vpack.c.b16 %v91, %v90
    %v98 = vpack.c.b16 %v93, %v92
    %v99 = vpack.c.b16 %v95, %v94
    %vm100 = vsmask.f32 7424
    %v102 = vshrl.u32 %v96, 16
    %v104 = vshll.u32 %v96, 16
    %v106 = vrot.slane %v104, 1
    %v107 = vor.u32 %v102, %v106
    %v109 = vshll.u32 %v97, 16
    %v111 = vrot.slane %v109, 1
    %v112 = vsel %vm100, %v107, %v111
    %v113 = vshrl.u32 %v97, 16
    %v115 = vor.u32 %v113, %v111
    %v117 = vshll.u32 %v98, 16
    %v119 = vrot.slane %v117, 1
    %v120 = vsel %vm100, %v115, %v119
    %v121 = vshrl.u32 %v98, 16
    %v123 = vor.u32 %v121, %v119
    %v125 = vshll.u32 %v99, 16
    %v127 = vrot.slane %v125, 1
    %v128 = vsel %vm100, %v123, %v127
    %v129 = vshrl.u32 %v99, 16
    %v131 = vor.u32 %v129, %v127
    %v144 = vunpack.c.l.b16 %v68
    %v145 = vunpack.c.h.b16 %v68
    %v146 = vunpack.c.l.b16 %v69
    %v147 = vunpack.c.h.b16 %v69
    %v148 = vunpack.c.l.b16 %v70
    %v149 = vunpack.c.h.b16 %v70
    %v150 = vunpack.c.l.b16 %v71
    %v151 = vunpack.c.h.b16 %v71
    %v152 = vunpack.c.l.b16 %v72
    %v153 = vunpack.c.h.b16 %v72
    %v154 = vunpack.c.l.b16 %v73
    %v155 = vunpack.c.h.b16 %v73
    %v156 = vunpack.c.l.b16 %v74
    %v157 = vunpack.c.h.b16 %v74
    %v158 = vunpack.c.l.b16 %v75
    %v159 = vunpack.c.h.b16 %v75
    %v160 = vunpack.c.l.b16 %v76
    %v161 = vunpack.c.h.b16 %v76
    %v162 = vunpack.c.l.b16 %v77
    %v163 = vunpack.c.h.b16 %v77
    %v164 = vunpack.c.l.b16 %v78
    %v165 = vunpack.c.h.b16 %v78
    %v166 = vunpack.c.l.b16 %v79
    %v167 = vunpack.c.h.b16 %v79
    %v168 = vpack.c.b16 %v146, %v144
    %v169 = vpack.c.b16 %v147, %v145
    %v170 = vpack.c.b16 %v150, %v148
    %v171 = vpack.c.b16 %v151, %v149
    %v172 = vpack.c.b16 %v154, %v152
    %v173 = vpack.c.b16 %v155, %v153
    %v174 = vpack.c.b16 %v158, %v156
    %v175 = vpack.c.b16 %v159, %v157
    %v176 = vpack.c.b16 %v162, %v160
    %v177 = vpack.c.b16 %v163, %v161
    %v178 = vpack.c.b16 %v166, %v164
    %v179 = vpack.c.b16 %v167, %v165
    %vm192 = vcmask 785408
    %v194 = vsel %vm192, %v112, 0
    %v197 = vsel %vm192, %v120, 0
    %v200 = vsel %vm192, %v128, 0
    %v203 = vsel %vm192, %v131, 0
    %205 = vmatprep.subr.bf16.mxu0 0
    %206 = vmatpush1.bf16.msra.mxu0 0
    %207 = vmatprep.subr.bf16.mxu0 0
    %208 = vmatpush1.bf16.msra.mxu0 0
    %209 = vmatprep.subr.bf16.mxu0 %v179
    %210 = vmatpush1.bf16.msra.mxu0 %v178
    %211 = vmatprep.subr.bf16.mxu0 %v177
    %212 = vmatpush1.bf16.msra.mxu0 %v176
    %213 = vmatprep.subr.bf16.mxu0 %v175
    %214 = vmatpush1.bf16.msra.mxu0 %v174
    %215 = vmatprep.subr.bf16.mxu0 %v173
    %216 = vmatpush1.bf16.msra.mxu0 %v172
    %217 = vmatprep.subr.bf16.mxu0 %v171
    %218 = vmatpush1.bf16.msra.mxu0 %v170
    %219 = vmatprep.subr.bf16.mxu0 %v169
    %220 = vmatpush1.bf16.msra.mxu0 %v168
    %221 = vmatprep.subr.bf16.mxu0 0
    %222 = vmatpush2.bf16.msra.mxu0 0
    %223 = vmatprep.subr.bf16.mxu0 0
    %224 = vmatpush2.bf16.msra.mxu0 0
    %225 = vmatprep.subr.bf16.mxu0 0
    %226 = vmatpush2.bf16.msra.mxu0 0
    %227 = vmatprep.subr.bf16.mxu0 0
    %228 = vmatpush2.bf16.msra.mxu0 0
    %229 = vmatprep.subr.bf16.mxu0 0
    %230 = vmatpush2.bf16.msra.mxu0 0
    %231 = vmatprep.subr.bf16.mxu0 0
    %232 = vmatpush2.bf16.msra.mxu0 0
    %233 = vmatprep.subr.bf16.mxu0 0
    %234 = vmatpush2.bf16.msra.mxu0 0
    %235 = vmatprep.subr.bf16.mxu0 0
    %236 = vmatpush2.bf16.msra.mxu0 0
    %237 = vmatprep.mubr.bf16.mxu0 0
    %238 = vmatmul.mubr.bf16.gmra.mxu0 %v194
    %v239 = vpop.f32.mrf.mxu0
    %v240 = vadd.f32 0.0, %v239
    %v241 = vpop.f32.mrf.mxu0
    %v242 = vadd.f32 0.0, %v241
    %v243 = vpop.f32.mrf.mxu0
    %v244 = vadd.f32 0.0, %v243
    %v245 = vpop.f32.mrf.mxu0
    %v246 = vadd.f32 0.0, %v245
    %247 = vmatprep.mubr.bf16.mxu0 0
    %248 = vmatmul.mubr.bf16.gmra.mxu0 %v197
    %v249 = vpop.f32.mrf.mxu0
    %v250 = vadd.f32 0.0, %v249
    %v251 = vpop.f32.mrf.mxu0
    %v252 = vadd.f32 0.0, %v251
    %v253 = vpop.f32.mrf.mxu0
    %v254 = vadd.f32 0.0, %v253
    %v255 = vpop.f32.mrf.mxu0
    %v256 = vadd.f32 0.0, %v255
    %257 = vmatprep.mubr.bf16.mxu0 0
    %258 = vmatmul.mubr.bf16.gmra.mxu0 %v200
    %v259 = vpop.f32.mrf.mxu0
    %v260 = vadd.f32 0.0, %v259
    %v261 = vpop.f32.mrf.mxu0
    %v262 = vadd.f32 0.0, %v261
    %v263 = vpop.f32.mrf.mxu0
    %v264 = vadd.f32 0.0, %v263
    %v265 = vpop.f32.mrf.mxu0
    %v266 = vadd.f32 0.0, %v265
    %267 = vmatprep.mubr.bf16.mxu0 0
    %268 = vmatmul.mubr.bf16.gmra.mxu0 %v203
    %v269 = vpop.f32.mrf.mxu0
    %v270 = vadd.f32 0.0, %v269
    %v271 = vpop.f32.mrf.mxu0
    %v272 = vadd.f32 0.0, %v271
    %v273 = vpop.f32.mrf.mxu0
    %v274 = vadd.f32 0.0, %v273
    %v275 = vpop.f32.mrf.mxu0
    %v276 = vadd.f32 0.0, %v275
    %277 = vdwg.mxu0
    %v279 = vunpack.c.l.b16 %v53
    %v280 = vpack.c.b16 %v279, %v94
    %v293 = vunpack.c.l.b16 %v54
    %v294 = vunpack.c.h.b16 %v54
    %v295 = vunpack.c.l.b16 %v55
    %v296 = vunpack.c.h.b16 %v55
    %v297 = vunpack.c.l.b16 %v56
    %v298 = vunpack.c.h.b16 %v56
    %v299 = vunpack.c.l.b16 %v57
    %v300 = vunpack.c.h.b16 %v57
    %v301 = vunpack.c.l.b16 %v58
    %v302 = vunpack.c.h.b16 %v58
    %v303 = vunpack.c.l.b16 %v59
    %v304 = vunpack.c.h.b16 %v59
    %v305 = vunpack.c.l.b16 %v60
    %v306 = vunpack.c.h.b16 %v60
    %v307 = vunpack.c.l.b16 %v61
    %v308 = vunpack.c.h.b16 %v61
    %v309 = vunpack.c.l.b16 %v62
    %v310 = vunpack.c.h.b16 %v62
    %v311 = vunpack.c.l.b16 %v63
    %v312 = vunpack.c.h.b16 %v63
    %v313 = vunpack.c.l.b16 %v64
    %v314 = vunpack.c.h.b16 %v64
    %v315 = vunpack.c.l.b16 %v65
    %v316 = vunpack.c.h.b16 %v65
    %v317 = vpack.c.b16 %v295, %v293
    %v318 = vpack.c.b16 %v296, %v294
    %v319 = vpack.c.b16 %v299, %v297
    %v320 = vpack.c.b16 %v300, %v298
    %v321 = vpack.c.b16 %v303, %v301
    %v322 = vpack.c.b16 %v304, %v302
    %v323 = vpack.c.b16 %v307, %v305
    %v324 = vpack.c.b16 %v308, %v306
    %v325 = vpack.c.b16 %v311, %v309
    %v326 = vpack.c.b16 %v312, %v310
    %v327 = vpack.c.b16 %v315, %v313
    %v328 = vpack.c.b16 %v316, %v314
    %v341 = vsel %vm192, %v96, 0
    %v343 = vsel %vm192, %v97, 0
    %v345 = vsel %vm192, %v98, 0
    %v348 = vsel %vm192, %v280, 0
    %350 = vmatprep.subr.bf16.mxu0 0
    %351 = vmatpush1.bf16.msra.mxu0 0
    %352 = vmatprep.subr.bf16.mxu0 0
    %353 = vmatpush1.bf16.msra.mxu0 0
    %354 = vmatprep.subr.bf16.mxu0 %v328
    %355 = vmatpush1.bf16.msra.mxu0 %v327
    %356 = vmatprep.subr.bf16.mxu0 %v326
    %357 = vmatpush1.bf16.msra.mxu0 %v325
    %358 = vmatprep.subr.bf16.mxu0 %v324
    %359 = vmatpush1.bf16.msra.mxu0 %v323
    %360 = vmatprep.subr.bf16.mxu0 %v322
    %361 = vmatpush1.bf16.msra.mxu0 %v321
    %362 = vmatprep.subr.bf16.mxu0 %v320
    %363 = vmatpush1.bf16.msra.mxu0 %v319
    %364 = vmatprep.subr.bf16.mxu0 %v318
    %365 = vmatpush1.bf16.msra.mxu0 %v317
    %366 = vmatprep.subr.bf16.mxu0 0
    %367 = vmatpush2.bf16.msra.mxu0 0
    %368 = vmatprep.subr.bf16.mxu0 0
    %369 = vmatpush2.bf16.msra.mxu0 0
    %370 = vmatprep.subr.bf16.mxu0 0
    %371 = vmatpush2.bf16.msra.mxu0 0
    %372 = vmatprep.subr.bf16.mxu0 0
    %373 = vmatpush2.bf16.msra.mxu0 0
    %374 = vmatprep.subr.bf16.mxu0 0
    %375 = vmatpush2.bf16.msra.mxu0 0
    %376 = vmatprep.subr.bf16.mxu0 0
    %377 = vmatpush2.bf16.msra.mxu0 0
    %378 = vmatprep.subr.bf16.mxu0 0
    %379 = vmatpush2.bf16.msra.mxu0 0
    %380 = vmatprep.subr.bf16.mxu0 0
    %381 = vmatpush2.bf16.msra.mxu0 0
    %382 = vmatprep.mubr.bf16.mxu0 0
    %383 = vmatmul.mubr.bf16.gmra.mxu0 %v341
    %v384 = vpop.f32.mrf.mxu0
    %v385 = vadd.f32 %v240, %v384
    %v386 = vpop.f32.mrf.mxu0
    %v387 = vadd.f32 %v242, %v386
    %v388 = vpop.f32.mrf.mxu0
    %v389 = vadd.f32 %v244, %v388
    %v390 = vpop.f32.mrf.mxu0
    %v391 = vadd.f32 %v246, %v390
    %392 = vmatprep.mubr.bf16.mxu0 0
    %393 = vmatmul.mubr.bf16.gmra.mxu0 %v343
    %v394 = vpop.f32.mrf.mxu0
    %v395 = vadd.f32 %v250, %v394
    %v396 = vpop.f32.mrf.mxu0
    %v397 = vadd.f32 %v252, %v396
    %v398 = vpop.f32.mrf.mxu0
    %v399 = vadd.f32 %v254, %v398
    %v400 = vpop.f32.mrf.mxu0
    %v401 = vadd.f32 %v256, %v400
    %402 = vmatprep.mubr.bf16.mxu0 0
    %403 = vmatmul.mubr.bf16.gmra.mxu0 %v345
    %v404 = vpop.f32.mrf.mxu0
    %v405 = vadd.f32 %v260, %v404
    %v406 = vpop.f32.mrf.mxu0
    %v407 = vadd.f32 %v262, %v406
    %v408 = vpop.f32.mrf.mxu0
    %v409 = vadd.f32 %v264, %v408
    %v410 = vpop.f32.mrf.mxu0
    %v411 = vadd.f32 %v266, %v410
    %412 = vmatprep.mubr.bf16.mxu0 0
    %413 = vmatmul.mubr.bf16.gmra.mxu0 %v348
    %v414 = vpop.f32.mrf.mxu0
    %v415 = vadd.f32 %v270, %v414
    %v416 = vpop.f32.mrf.mxu0
    %v417 = vadd.f32 %v272, %v416
    %v418 = vpop.f32.mrf.mxu0
    %v419 = vadd.f32 %v274, %v418
    %v420 = vpop.f32.mrf.mxu0
    %v421 = vadd.f32 %v276, %v420
    %422 = vdwg.mxu0
    %v423 = vld [vmem:[%s0] sm:$0xe]
    %s424 = scalar_lea.vmem %s1, 192
    %v425 = vld [vmem:[%s424] sm:$0xff]
    %v426 = vld [vmem:[%s424 + $0x8] sm:$0xff]
    %v427 = vld [vmem:[%s424 + $0x10] sm:$0xff]
    %v428 = vld [vmem:[%s424 + $0x18] sm:$0xff]
    %v429 = vld [vmem:[%s424 + $0x20] sm:$0xff]
    %v430 = vld [vmem:[%s424 + $0x28] sm:$0xff]
    %v431 = vld [vmem:[%s424 + $0x30] sm:$0xff]
    %v432 = vld [vmem:[%s424 + $0x38] sm:$0xff]
    %v433 = vld [vmem:[%s424 + $0x40] sm:$0xff]
    %v434 = vld [vmem:[%s424 + $0x48] sm:$0xff]
    %v435 = vld [vmem:[%s424 + $0x50] sm:$0xff]
    %v436 = vld [vmem:[%s424 + $0x58] sm:$0xff]
    %v438 = vunpack.c.l.b16 %v423
    %v439 = vpack.c.b16 %v89, %v438
    %vm440 = vcmask 1046528
    %v441 = vrot.slane %v439, 1
    %v442 = vrot.slane %v97, 1
    %v443 = vsel %vm440, %v441, %v442
    %v444 = vrot.slane %v98, 1
    %v445 = vsel %vm440, %v442, %v444
    %v446 = vrot.slane %v99, 1
    %v447 = vsel %vm440, %v444, %v446
    %v460 = vunpack.c.l.b16 %v425
    %v461 = vunpack.c.h.b16 %v425
    %v462 = vunpack.c.l.b16 %v426
    %v463 = vunpack.c.h.b16 %v426
    %v464 = vunpack.c.l.b16 %v427
    %v465 = vunpack.c.h.b16 %v427
    %v466 = vunpack.c.l.b16 %v428
    %v467 = vunpack.c.h.b16 %v428
    %v468 = vunpack.c.l.b16 %v429
    %v469 = vunpack.c.h.b16 %v429
    %v470 = vunpack.c.l.b16 %v430
    %v471 = vunpack.c.h.b16 %v430
    %v472 = vunpack.c.l.b16 %v431
    %v473 = vunpack.c.h.b16 %v431
    %v474 = vunpack.c.l.b16 %v432
    %v475 = vunpack.c.h.b16 %v432
    %v476 = vunpack.c.l.b16 %v433
    %v477 = vunpack.c.h.b16 %v433
    %v478 = vunpack.c.l.b16 %v434
    %v479 = vunpack.c.h.b16 %v434
    %v480 = vunpack.c.l.b16 %v435
    %v481 = vunpack.c.h.b16 %v435
    %v482 = vunpack.c.l.b16 %v436
    %v483 = vunpack.c.h.b16 %v436
    %v484 = vpack.c.b16 %v462, %v460
    %v485 = vpack.c.b16 %v463, %v461
    %v486 = vpack.c.b16 %v466, %v464
    %v487 = vpack.c.b16 %v467, %v465
    %v488 = vpack.c.b16 %v470, %v468
    %v489 = vpack.c.b16 %v471, %v469
    %v490 = vpack.c.b16 %v474, %v472
    %v491 = vpack.c.b16 %v475, %v473
    %v492 = vpack.c.b16 %v478, %v476
    %v493 = vpack.c.b16 %v479, %v477
    %v494 = vpack.c.b16 %v482, %v480
    %v495 = vpack.c.b16 %v483, %v481
    %v509 = vsel %vm192, %v443, 0
    %v512 = vsel %vm192, %v445, 0
    %v515 = vsel %vm192, %v447, 0
    %v518 = vsel %vm192, %v446, 0
    %520 = vmatprep.subr.bf16.mxu0 0
    %521 = vmatpush1.bf16.msra.mxu0 0
    %522 = vmatprep.subr.bf16.mxu0 0
    %523 = vmatpush1.bf16.msra.mxu0 0
    %524 = vmatprep.subr.bf16.mxu0 %v495
    %525 = vmatpush1.bf16.msra.mxu0 %v494
    %526 = vmatprep.subr.bf16.mxu0 %v493
    %527 = vmatpush1.bf16.msra.mxu0 %v492
    %528 = vmatprep.subr.bf16.mxu0 %v491
    %529 = vmatpush1.bf16.msra.mxu0 %v490
    %530 = vmatprep.subr.bf16.mxu0 %v489
    %531 = vmatpush1.bf16.msra.mxu0 %v488
    %532 = vmatprep.subr.bf16.mxu0 %v487
    %533 = vmatpush1.bf16.msra.mxu0 %v486
    %534 = vmatprep.subr.bf16.mxu0 %v485
    %535 = vmatpush1.bf16.msra.mxu0 %v484
    %536 = vmatprep.subr.bf16.mxu0 0
    %537 = vmatpush2.bf16.msra.mxu0 0
    %538 = vmatprep.subr.bf16.mxu0 0
    %539 = vmatpush2.bf16.msra.mxu0 0
    %540 = vmatprep.subr.bf16.mxu0 0
    %541 = vmatpush2.bf16.msra.mxu0 0
    %542 = vmatprep.subr.bf16.mxu0 0
    %543 = vmatpush2.bf16.msra.mxu0 0
    %544 = vmatprep.subr.bf16.mxu0 0
    %545 = vmatpush2.bf16.msra.mxu0 0
    %546 = vmatprep.subr.bf16.mxu0 0
    %547 = vmatpush2.bf16.msra.mxu0 0
    %548 = vmatprep.subr.bf16.mxu0 0
    %549 = vmatpush2.bf16.msra.mxu0 0
    %550 = vmatprep.subr.bf16.mxu0 0
    %551 = vmatpush2.bf16.msra.mxu0 0
    %552 = vmatprep.mubr.bf16.mxu0 0
    %553 = vmatmul.mubr.bf16.gmra.mxu0 %v509
    %v554 = vpop.f32.mrf.mxu0
    %v555 = vadd.f32 0.0, %v554
    %v556 = vpop.f32.mrf.mxu0
    %v557 = vadd.f32 0.0, %v556
    %v558 = vpop.f32.mrf.mxu0
    %v559 = vadd.f32 0.0, %v558
    %v560 = vpop.f32.mrf.mxu0
    %v561 = vadd.f32 0.0, %v560
    %562 = vmatprep.mubr.bf16.mxu0 0
    %563 = vmatmul.mubr.bf16.gmra.mxu0 %v512
    %v564 = vpop.f32.mrf.mxu0
    %v565 = vadd.f32 0.0, %v564
    %v566 = vpop.f32.mrf.mxu0
    %v567 = vadd.f32 0.0, %v566
    %v568 = vpop.f32.mrf.mxu0
    %v569 = vadd.f32 0.0, %v568
    %v570 = vpop.f32.mrf.mxu0
    %v571 = vadd.f32 0.0, %v570
    %572 = vmatprep.mubr.bf16.mxu0 0
    %573 = vmatmul.mubr.bf16.gmra.mxu0 %v515
    %v574 = vpop.f32.mrf.mxu0
    %v575 = vadd.f32 0.0, %v574
    %v576 = vpop.f32.mrf.mxu0
    %v577 = vadd.f32 0.0, %v576
    %v578 = vpop.f32.mrf.mxu0
    %v579 = vadd.f32 0.0, %v578
    %v580 = vpop.f32.mrf.mxu0
    %v581 = vadd.f32 0.0, %v580
    %582 = vmatprep.mubr.bf16.mxu0 0
    %583 = vmatmul.mubr.bf16.gmra.mxu0 %v518
    %v584 = vpop.f32.mrf.mxu0
    %v585 = vadd.f32 0.0, %v584
    %v586 = vpop.f32.mrf.mxu0
    %v587 = vadd.f32 0.0, %v586
    %v588 = vpop.f32.mrf.mxu0
    %v589 = vadd.f32 0.0, %v588
    %v590 = vpop.f32.mrf.mxu0
    %v591 = vadd.f32 0.0, %v590
    %592 = vdwg.mxu0
    %v593 = vadd.f32 %v385, %v555
    %v594 = vadd.f32 %v387, %v557
    %v595 = vadd.f32 %v389, %v559
    %v596 = vadd.f32 %v391, %v561
    %v597 = vadd.f32 %v395, %v565
    %v598 = vadd.f32 %v397, %v567
    %v599 = vadd.f32 %v399, %v569
    %v600 = vadd.f32 %v401, %v571
    %v601 = vadd.f32 %v405, %v575
    %v602 = vadd.f32 %v407, %v577
    %v603 = vadd.f32 %v409, %v579
    %v604 = vadd.f32 %v411, %v581
    %v605 = vadd.f32 %v415, %v585
    %v606 = vadd.f32 %v417, %v587
    %v607 = vadd.f32 %v419, %v589
    %v608 = vadd.f32 %v421, %v591
    %v609 = vld [vmem:[%s0 + $0x1c] sm:$0xf]
    %s610 = scalar_lea.vmem %s1, 288
    %v611 = vld [vmem:[%s610] sm:$0xff]
    %v612 = vld [vmem:[%s610 + $0x8] sm:$0xff]
    %v613 = vld [vmem:[%s610 + $0x10] sm:$0xff]
    %v614 = vld [vmem:[%s610 + $0x18] sm:$0xff]
    %v615 = vld [vmem:[%s610 + $0x20] sm:$0xff]
    %v616 = vld [vmem:[%s610 + $0x28] sm:$0xff]
    %v617 = vld [vmem:[%s610 + $0x30] sm:$0xff]
    %v618 = vld [vmem:[%s610 + $0x38] sm:$0xff]
    %v619 = vld [vmem:[%s610 + $0x40] sm:$0xff]
    %v620 = vld [vmem:[%s610 + $0x48] sm:$0xff]
    %v621 = vld [vmem:[%s610 + $0x50] sm:$0xff]
    %v622 = vld [vmem:[%s610 + $0x58] sm:$0xff]
    %v624 = vunpack.c.l.b16 %v609
    %v625 = vpack.c.b16 %v624, %v94
    %vm626 = vsmask.f32 6400
    %v628 = vshrl.u32 %v439, 16
    %v630 = vrot.slane %v628, 1
    %v631 = vshll.u32 %v439, 16
    %v633 = vrot.slane %v631, 2
    %v634 = vor.u32 %v630, %v633
    %v635 = vrot.slane %v113, 1
    %v636 = vrot.slane %v109, 2
    %v637 = vor.u32 %v635, %v636
    %v638 = vsel %vm626, %v634, %v637
    %v639 = vrot.slane %v121, 1
    %v640 = vrot.slane %v117, 2
    %v641 = vor.u32 %v639, %v640
    %v642 = vsel %vm626, %v637, %v641
    %v644 = vshrl.u32 %v625, 16
    %v646 = vrot.slane %v644, 1
    %v647 = vshll.u32 %v625, 16
    %v649 = vrot.slane %v647, 2
    %v650 = vor.u32 %v646, %v649
    %v651 = vsel %vm626, %v641, %v650
    %v664 = vunpack.c.l.b16 %v611
    %v665 = vunpack.c.h.b16 %v611
    %v666 = vunpack.c.l.b16 %v612
    %v667 = vunpack.c.h.b16 %v612
    %v668 = vunpack.c.l.b16 %v613
    %v669 = vunpack.c.h.b16 %v613
    %v670 = vunpack.c.l.b16 %v614
    %v671 = vunpack.c.h.b16 %v614
    %v672 = vunpack.c.l.b16 %v615
    %v673 = vunpack.c.h.b16 %v615
    %v674 = vunpack.c.l.b16 %v616
    %v675 = vunpack.c.h.b16 %v616
    %v676 = vunpack.c.l.b16 %v617
    %v677 = vunpack.c.h.b16 %v617
    %v678 = vunpack.c.l.b16 %v618
    %v679 = vunpack.c.h.b16 %v618
    %v680 = vunpack.c.l.b16 %v619
    %v681 = vunpack.c.h.b16 %v619
    %v682 = vunpack.c.l.b16 %v620
    %v683 = vunpack.c.h.b16 %v620
    %v684 = vunpack.c.l.b16 %v621
    %v685 = vunpack.c.h.b16 %v621
    %v686 = vunpack.c.l.b16 %v622
    %v687 = vunpack.c.h.b16 %v622
    %v688 = vpack.c.b16 %v666, %v664
    %v689 = vpack.c.b16 %v667, %v665
    %v690 = vpack.c.b16 %v670, %v668
    %v691 = vpack.c.b16 %v671, %v669
    %v692 = vpack.c.b16 %v674, %v672
    %v693 = vpack.c.b16 %v675, %v673
    %v694 = vpack.c.b16 %v678, %v676
    %v695 = vpack.c.b16 %v679, %v677
    %v696 = vpack.c.b16 %v682, %v680
    %v697 = vpack.c.b16 %v683, %v681
    %v698 = vpack.c.b16 %v686, %v684
    %v699 = vpack.c.b16 %v687, %v685
    %v713 = vsel %vm192, %v638, 0
    %v716 = vsel %vm192, %v642, 0
    %v719 = vsel %vm192, %v651, 0
    %v722 = vsel %vm192, %v650, 0
    %724 = vmatprep.subr.bf16.mxu0 0
    %725 = vmatpush1.bf16.msra.mxu0 0
    %726 = vmatprep.subr.bf16.mxu0 0
    %727 = vmatpush1.bf16.msra.mxu0 0
    %728 = vmatprep.subr.bf16.mxu0 %v699
    %729 = vmatpush1.bf16.msra.mxu0 %v698
    %730 = vmatprep.subr.bf16.mxu0 %v697
    %731 = vmatpush1.bf16.msra.mxu0 %v696
    %732 = vmatprep.subr.bf16.mxu0 %v695
    %733 = vmatpush1.bf16.msra.mxu0 %v694
    %734 = vmatprep.subr.bf16.mxu0 %v693
    %735 = vmatpush1.bf16.msra.mxu0 %v692
    %736 = vmatprep.subr.bf16.mxu0 %v691
    %737 = vmatpush1.bf16.msra.mxu0 %v690
    %738 = vmatprep.subr.bf16.mxu0 %v689
    %739 = vmatpush1.bf16.msra.mxu0 %v688
    %740 = vmatprep.subr.bf16.mxu0 0
    %741 = vmatpush2.bf16.msra.mxu0 0
    %742 = vmatprep.subr.bf16.mxu0 0
    %743 = vmatpush2.bf16.msra.mxu0 0
    %744 = vmatprep.subr.bf16.mxu0 0
    %745 = vmatpush2.bf16.msra.mxu0 0
    %746 = vmatprep.subr.bf16.mxu0 0
    %747 = vmatpush2.bf16.msra.mxu0 0
    %748 = vmatprep.subr.bf16.mxu0 0
    %749 = vmatpush2.bf16.msra.mxu0 0
    %750 = vmatprep.subr.bf16.mxu0 0
    %751 = vmatpush2.bf16.msra.mxu0 0
    %752 = vmatprep.subr.bf16.mxu0 0
    %753 = vmatpush2.bf16.msra.mxu0 0
    %754 = vmatprep.subr.bf16.mxu0 0
    %755 = vmatpush2.bf16.msra.mxu0 0
    %756 = vmatprep.mubr.bf16.mxu0 0
    %757 = vmatmul.mubr.bf16.gmra.mxu0 %v713
    %v758 = vpop.f32.mrf.mxu0
    %v759 = vadd.f32 0.0, %v758
    %v760 = vpop.f32.mrf.mxu0
    %v761 = vadd.f32 0.0, %v760
    %v762 = vpop.f32.mrf.mxu0
    %v763 = vadd.f32 0.0, %v762
    %v764 = vpop.f32.mrf.mxu0
    %v765 = vadd.f32 0.0, %v764
    %766 = vmatprep.mubr.bf16.mxu0 0
    %767 = vmatmul.mubr.bf16.gmra.mxu0 %v716
    %v768 = vpop.f32.mrf.mxu0
    %v769 = vadd.f32 0.0, %v768
    %v770 = vpop.f32.mrf.mxu0
    %v771 = vadd.f32 0.0, %v770
    %v772 = vpop.f32.mrf.mxu0
    %v773 = vadd.f32 0.0, %v772
    %v774 = vpop.f32.mrf.mxu0
    %v775 = vadd.f32 0.0, %v774
    %776 = vmatprep.mubr.bf16.mxu0 0
    %777 = vmatmul.mubr.bf16.gmra.mxu0 %v719
    %v778 = vpop.f32.mrf.mxu0
    %v779 = vadd.f32 0.0, %v778
    %v780 = vpop.f32.mrf.mxu0
    %v781 = vadd.f32 0.0, %v780
    %v782 = vpop.f32.mrf.mxu0
    %v783 = vadd.f32 0.0, %v782
    %v784 = vpop.f32.mrf.mxu0
    %v785 = vadd.f32 0.0, %v784
    %786 = vmatprep.mubr.bf16.mxu0 0
    %787 = vmatmul.mubr.bf16.gmra.mxu0 %v722
    %v788 = vpop.f32.mrf.mxu0
    %v789 = vadd.f32 0.0, %v788
    %v790 = vpop.f32.mrf.mxu0
    %v791 = vadd.f32 0.0, %v790
    %v792 = vpop.f32.mrf.mxu0
    %v793 = vadd.f32 0.0, %v792
    %v794 = vpop.f32.mrf.mxu0
    %v795 = vadd.f32 0.0, %v794
    %796 = vdwg.mxu0
    %v797 = vadd.f32 %v593, %v759
    %v798 = vadd.f32 %v594, %v761
    %v799 = vadd.f32 %v595, %v763
    %v800 = vadd.f32 %v596, %v765
    %v801 = vadd.f32 %v597, %v769
    %v802 = vadd.f32 %v598, %v771
    %v803 = vadd.f32 %v599, %v773
    %v804 = vadd.f32 %v600, %v775
    %v805 = vadd.f32 %v601, %v779
    %v806 = vadd.f32 %v602, %v781
    %v807 = vadd.f32 %v603, %v783
    %v808 = vadd.f32 %v604, %v785
    %v809 = vadd.f32 %v605, %v789
    %v810 = vadd.f32 %v606, %v791
    %v811 = vadd.f32 %v607, %v793
    %v812 = vadd.f32 %v608, %v795
    %v813 = vld [vmem:[%s0] sm:$0xc]
    %s814 = scalar_lea.vmem %s1, 384
    %v815 = vld [vmem:[%s814] sm:$0xff]
    %v816 = vld [vmem:[%s814 + $0x8] sm:$0xff]
    %v817 = vld [vmem:[%s814 + $0x10] sm:$0xff]
    %v818 = vld [vmem:[%s814 + $0x18] sm:$0xff]
    %v819 = vld [vmem:[%s814 + $0x20] sm:$0xff]
    %v820 = vld [vmem:[%s814 + $0x28] sm:$0xff]
    %v821 = vld [vmem:[%s814 + $0x30] sm:$0xff]
    %v822 = vld [vmem:[%s814 + $0x38] sm:$0xff]
    %v823 = vld [vmem:[%s814 + $0x40] sm:$0xff]
    %v824 = vld [vmem:[%s814 + $0x48] sm:$0xff]
    %v825 = vld [vmem:[%s814 + $0x50] sm:$0xff]
    %v826 = vld [vmem:[%s814 + $0x58] sm:$0xff]
    %v828 = vunpack.c.l.b16 %v813
    %v829 = vpack.c.b16 %v89, %v828
    %vm830 = vcmask 1045504
    %v831 = vrot.slane %v829, 2
    %v832 = vrot.slane %v97, 2
    %v833 = vsel %vm830, %v831, %v832
    %v834 = vrot.slane %v98, 2
    %v835 = vsel %vm830, %v832, %v834
    %v836 = vrot.slane %v625, 2
    %v837 = vsel %vm830, %v834, %v836
    %v850 = vunpack.c.l.b16 %v815
    %v851 = vunpack.c.h.b16 %v815
    %v852 = vunpack.c.l.b16 %v816
    %v853 = vunpack.c.h.b16 %v816
    %v854 = vunpack.c.l.b16 %v817
    %v855 = vunpack.c.h.b16 %v817
    %v856 = vunpack.c.l.b16 %v818
    %v857 = vunpack.c.h.b16 %v818
    %v858 = vunpack.c.l.b16 %v819
    %v859 = vunpack.c.h.b16 %v819
    %v860 = vunpack.c.l.b16 %v820
    %v861 = vunpack.c.h.b16 %v820
    %v862 = vunpack.c.l.b16 %v821
    %v863 = vunpack.c.h.b16 %v821
    %v864 = vunpack.c.l.b16 %v822
    %v865 = vunpack.c.h.b16 %v822
    %v866 = vunpack.c.l.b16 %v823
    %v867 = vunpack.c.h.b16 %v823
    %v868 = vunpack.c.l.b16 %v824
    %v869 = vunpack.c.h.b16 %v824
    %v870 = vunpack.c.l.b16 %v825
    %v871 = vunpack.c.h.b16 %v825
    %v872 = vunpack.c.l.b16 %v826
    %v873 = vunpack.c.h.b16 %v826
    %v874 = vpack.c.b16 %v852, %v850
    %v875 = vpack.c.b16 %v853, %v851
    %v876 = vpack.c.b16 %v856, %v854
    %v877 = vpack.c.b16 %v857, %v855
    %v878 = vpack.c.b16 %v860, %v858
    %v879 = vpack.c.b16 %v861, %v859
    %v880 = vpack.c.b16 %v864, %v862
    %v881 = vpack.c.b16 %v865, %v863
    %v882 = vpack.c.b16 %v868, %v866
    %v883 = vpack.c.b16 %v869, %v867
    %v884 = vpack.c.b16 %v872, %v870
    %v885 = vpack.c.b16 %v873, %v871
    %v899 = vsel %vm192, %v833, 0
    %v902 = vsel %vm192, %v835, 0
    %v905 = vsel %vm192, %v837, 0
    %v908 = vsel %vm192, %v836, 0
    %910 = vmatprep.subr.bf16.mxu0 0
    %911 = vmatpush1.bf16.msra.mxu0 0
    %912 = vmatprep.subr.bf16.mxu0 0
    %913 = vmatpush1.bf16.msra.mxu0 0
    %914 = vmatprep.subr.bf16.mxu0 %v885
    %915 = vmatpush1.bf16.msra.mxu0 %v884
    %916 = vmatprep.subr.bf16.mxu0 %v883
    %917 = vmatpush1.bf16.msra.mxu0 %v882
    %918 = vmatprep.subr.bf16.mxu0 %v881
    %919 = vmatpush1.bf16.msra.mxu0 %v880
    %920 = vmatprep.subr.bf16.mxu0 %v879
    %921 = vmatpush1.bf16.msra.mxu0 %v878
    %922 = vmatprep.subr.bf16.mxu0 %v877
    %923 = vmatpush1.bf16.msra.mxu0 %v876
    %924 = vmatprep.subr.bf16.mxu0 %v875
    %925 = vmatpush1.bf16.msra.mxu0 %v874
    %926 = vmatprep.subr.bf16.mxu0 0
    %927 = vmatpush2.bf16.msra.mxu0 0
    %928 = vmatprep.subr.bf16.mxu0 0
    %929 = vmatpush2.bf16.msra.mxu0 0
    %930 = vmatprep.subr.bf16.mxu0 0
    %931 = vmatpush2.bf16.msra.mxu0 0
    %932 = vmatprep.subr.bf16.mxu0 0
    %933 = vmatpush2.bf16.msra.mxu0 0
    %934 = vmatprep.subr.bf16.mxu0 0
    %935 = vmatpush2.bf16.msra.mxu0 0
    %936 = vmatprep.subr.bf16.mxu0 0
    %937 = vmatpush2.bf16.msra.mxu0 0
    %938 = vmatprep.subr.bf16.mxu0 0
    %939 = vmatpush2.bf16.msra.mxu0 0
    %940 = vmatprep.subr.bf16.mxu0 0
    %941 = vmatpush2.bf16.msra.mxu0 0
    %942 = vmatprep.mubr.bf16.mxu0 0
    %943 = vmatmul.mubr.bf16.gmra.mxu0 %v899
    %v944 = vpop.f32.mrf.mxu0
    %v945 = vadd.f32 0.0, %v944
    %v946 = vpop.f32.mrf.mxu0
    %v947 = vadd.f32 0.0, %v946
    %v948 = vpop.f32.mrf.mxu0
    %v949 = vadd.f32 0.0, %v948
    %v950 = vpop.f32.mrf.mxu0
    %v951 = vadd.f32 0.0, %v950
    %952 = vmatprep.mubr.bf16.mxu0 0
    %953 = vmatmul.mubr.bf16.gmra.mxu0 %v902
    %v954 = vpop.f32.mrf.mxu0
    %v955 = vadd.f32 0.0, %v954
    %v956 = vpop.f32.mrf.mxu0
    %v957 = vadd.f32 0.0, %v956
    %v958 = vpop.f32.mrf.mxu0
    %v959 = vadd.f32 0.0, %v958
    %v960 = vpop.f32.mrf.mxu0
    %v961 = vadd.f32 0.0, %v960
    %962 = vmatprep.mubr.bf16.mxu0 0
    %963 = vmatmul.mubr.bf16.gmra.mxu0 %v905
    %v964 = vpop.f32.mrf.mxu0
    %v965 = vadd.f32 0.0, %v964
    %v966 = vpop.f32.mrf.mxu0
    %v967 = vadd.f32 0.0, %v966
    %v968 = vpop.f32.mrf.mxu0
    %v969 = vadd.f32 0.0, %v968
    %v970 = vpop.f32.mrf.mxu0
    %v971 = vadd.f32 0.0, %v970
    %972 = vmatprep.mubr.bf16.mxu0 0
    %973 = vmatmul.mubr.bf16.gmra.mxu0 %v908
    %v974 = vpop.f32.mrf.mxu0
    %v975 = vadd.f32 0.0, %v974
    %v976 = vpop.f32.mrf.mxu0
    %v977 = vadd.f32 0.0, %v976
    %v978 = vpop.f32.mrf.mxu0
    %v979 = vadd.f32 0.0, %v978
    %v980 = vpop.f32.mrf.mxu0
    %v981 = vadd.f32 0.0, %v980
    %982 = vdwg.mxu0
    %v983 = vadd.f32 %v797, %v945
    %v984 = vadd.f32 %v798, %v947
    %v985 = vadd.f32 %v799, %v949
    %v986 = vadd.f32 %v800, %v951
    %v987 = vadd.f32 %v801, %v955
    %v988 = vadd.f32 %v802, %v957
    %v989 = vadd.f32 %v803, %v959
    %v990 = vadd.f32 %v804, %v961
    %v991 = vadd.f32 %v805, %v965
    %v992 = vadd.f32 %v806, %v967
    %v993 = vadd.f32 %v807, %v969
    %v994 = vadd.f32 %v808, %v971
    %v995 = vadd.f32 %v809, %v975
    %v996 = vadd.f32 %v810, %v977
    %v997 = vadd.f32 %v811, %v979
    %v998 = vadd.f32 %v812, %v981
    %v999 = vld [vmem:[%s2] sm:$0x3]
    %v1001 = vlaneseq
    %v1002 = vshrl.u32 %v1001, 7
    %v1003 = vsub.s32 0, %v1002
    %v1004 = vrot.slane %v999, %v1003
    %v1005 = vlaneseq
    %v1006 = vshrl.u32 %v1005, 7
    %v1007 = vsub.s32 1, %v1006
    %v1008 = vrot.slane %v999, %v1007
    %v1011 = vadd.f32 %v983, %v1004
    %v1012 = vadd.f32 %v984, %v1008
    %v1013 = vadd.f32 %v985, %v1004
    %v1014 = vadd.f32 %v986, %v1008
    %v1015 = vadd.f32 %v987, %v1004
    %v1016 = vadd.f32 %v988, %v1008
    %v1017 = vadd.f32 %v989, %v1004
    %v1018 = vadd.f32 %v990, %v1008
    %v1019 = vadd.f32 %v991, %v1004
    %v1020 = vadd.f32 %v992, %v1008
    %v1021 = vadd.f32 %v993, %v1004
    %v1022 = vadd.f32 %v994, %v1008
    %v1023 = vadd.f32 %v995, %v1004
    %v1024 = vadd.f32 %v996, %v1008
    %v1025 = vadd.f32 %v997, %v1004
    %v1026 = vadd.f32 %v998, %v1008
    %v1027 = vmax.f32 %v1011, 0.0
    %v1028 = vmax.f32 %v1012, 0.0
    %v1029 = vmax.f32 %v1013, 0.0
    %v1030 = vmax.f32 %v1014, 0.0
    %v1031 = vmax.f32 %v1015, 0.0
    %v1032 = vmax.f32 %v1016, 0.0
    %v1033 = vmax.f32 %v1017, 0.0
    %v1034 = vmax.f32 %v1018, 0.0
    %v1035 = vmax.f32 %v1019, 0.0
    %v1036 = vmax.f32 %v1020, 0.0
    %v1037 = vmax.f32 %v1021, 0.0
    %v1038 = vmax.f32 %v1022, 0.0
    %v1039 = vmax.f32 %v1023, 0.0
    %v1040 = vmax.f32 %v1024, 0.0
    %v1041 = vmax.f32 %v1025, 0.0
    %v1042 = vmax.f32 %v1026, 0.0
    %1059 = vrot.lane.b32.xlu0 %v1027, 122
    %v1060 = vpop.permute.xlu0 %1059
    %1061 = vrot.lane.b32.xlu0 %v1028, 122
    %v1062 = vpop.permute.xlu0 %1061
    %1063 = vrot.lane.b32.xlu0 %v1029, 122
    %v1064 = vpop.permute.xlu0 %1063
    %1065 = vrot.lane.b32.xlu0 %v1030, 122
    %v1066 = vpop.permute.xlu0 %1065
    %1067 = vrot.lane.b32.xlu0 %v1031, 122
    %v1068 = vpop.permute.xlu0 %1067
    %1069 = vrot.lane.b32.xlu0 %v1032, 122
    %v1070 = vpop.permute.xlu0 %1069
    %1071 = vrot.lane.b32.xlu0 %v1033, 122
    %v1072 = vpop.permute.xlu0 %1071
    %1073 = vrot.lane.b32.xlu0 %v1034, 122
    %v1074 = vpop.permute.xlu0 %1073
    %1075 = vrot.lane.b32.xlu0 %v1035, 122
    %v1076 = vpop.permute.xlu0 %1075
    %1077 = vrot.lane.b32.xlu0 %v1036, 122
    %v1078 = vpop.permute.xlu0 %1077
    %1079 = vrot.lane.b32.xlu0 %v1037, 122
    %v1080 = vpop.permute.xlu0 %1079
    %1081 = vrot.lane.b32.xlu0 %v1038, 122
    %v1082 = vpop.permute.xlu0 %1081
    %1083 = vrot.lane.b32.xlu0 %v1039, 122
    %v1084 = vpop.permute.xlu0 %1083
    %1085 = vrot.lane.b32.xlu0 %v1040, 122
    %v1086 = vpop.permute.xlu0 %1085
    %1087 = vrot.lane.b32.xlu0 %v1041, 122
    %v1088 = vpop.permute.xlu0 %1087
    %1089 = vrot.lane.b32.xlu0 %v1042, 122
    %v1090 = vpop.permute.xlu0 %1089
    %vm1091 = vcmask 998400
    %v1092 = vsel %vm1091, %v1060, %v1062
    %v1093 = vsel %vm1091, %v1064, %v1066
    %v1094 = vsel %vm1091, %v1068, %v1070
    %v1095 = vsel %vm1091, %v1072, %v1074
    %v1096 = vsel %vm1091, %v1076, %v1078
    %v1097 = vsel %vm1091, %v1080, %v1082
    %v1098 = vsel %vm1091, %v1084, %v1086
    %v1099 = vsel %vm1091, %v1088, %v1090
    %v1116 = vmax.f32 %v1027, %v1092
    %v1117 = vmax.f32 %v1028, %v1062
    %v1118 = vmax.f32 %v1029, %v1093
    %v1119 = vmax.f32 %v1030, %v1066
    %v1120 = vmax.f32 %v1031, %v1094
    %v1121 = vmax.f32 %v1032, %v1070
    %v1122 = vmax.f32 %v1033, %v1095
    %v1123 = vmax.f32 %v1034, %v1074
    %v1124 = vmax.f32 %v1035, %v1096
    %v1125 = vmax.f32 %v1036, %v1078
    %v1126 = vmax.f32 %v1037, %v1097
    %v1127 = vmax.f32 %v1038, %v1082
    %v1128 = vmax.f32 %v1039, %v1098
    %v1129 = vmax.f32 %v1040, %v1086
    %v1130 = vmax.f32 %v1041, %v1099
    %v1131 = vmax.f32 %v1042, %v1090
    %v1132 = vpack.c.bf16 %v1118, %v1116
    %v1133 = vpack.c.bf16 %v1119, %v1117
    %v1134 = vpack.c.bf16 %v1122, %v1120
    %v1135 = vpack.c.bf16 %v1123, %v1121
    %v1136 = vpack.c.bf16 %v1126, %v1124
    %v1137 = vpack.c.bf16 %v1127, %v1125
    %v1138 = vpack.c.bf16 %v1130, %v1128
    %v1139 = vpack.c.bf16 %v1131, %v1129
    %v1140 = vld [vmem:[%s3] sm:$0xf]
    %v1141 = vld [vmem:[%s3 + $0x4] sm:$0xf]
    %v1142 = vld [vmem:[%s3 + $0x8] sm:$0xf]
    %v1143 = vld [vmem:[%s3 + $0xc] sm:$0xf]
    %v1144 = vld [vmem:[%s3 + $0x10] sm:$0xf]
    %v1145 = vld [vmem:[%s3 + $0x14] sm:$0xf]
    %v1146 = vld [vmem:[%s3 + $0x18] sm:$0xf]
    %v1147 = vld [vmem:[%s3 + $0x1c] sm:$0xf]
    %v1148 = vld [vmem:[%s3 + $0x20] sm:$0xf]
    %v1149 = vld [vmem:[%s3 + $0x24] sm:$0xf]
    %v1150 = vld [vmem:[%s3 + $0x28] sm:$0xf]
    %v1151 = vld [vmem:[%s3 + $0x2c] sm:$0xf]
    %v1152 = vld [vmem:[%s3 + $0x30] sm:$0xf]
    %v1153 = vld [vmem:[%s3 + $0x34] sm:$0xf]
    %v1154 = vld [vmem:[%s3 + $0x38] sm:$0xf]
    %v1155 = vld [vmem:[%s3 + $0x3c] sm:$0xf]
    %v1156 = vld [vmem:[%s3 + $0x40] sm:$0xf]
    %v1157 = vld [vmem:[%s3 + $0x44] sm:$0xf]
    %v1158 = vld [vmem:[%s3 + $0x48] sm:$0xf]
    %v1159 = vld [vmem:[%s3 + $0x4c] sm:$0xf]
    %v1160 = vld [vmem:[%s3 + $0x50] sm:$0x1]
    %v1182 = vunpack.c.l.b16 %v1140
    %v1183 = vunpack.c.l.b16 %v1141
    %v1184 = vunpack.c.l.b16 %v1142
    %v1185 = vunpack.c.l.b16 %v1143
    %v1186 = vunpack.c.l.b16 %v1144
    %v1187 = vunpack.c.l.b16 %v1145
    %v1188 = vunpack.c.l.b16 %v1146
    %v1189 = vunpack.c.l.b16 %v1147
    %v1190 = vunpack.c.l.b16 %v1148
    %v1191 = vunpack.c.l.b16 %v1149
    %v1192 = vunpack.c.l.b16 %v1150
    %v1193 = vunpack.c.l.b16 %v1151
    %v1194 = vunpack.c.l.b16 %v1152
    %v1195 = vunpack.c.l.b16 %v1153
    %v1196 = vunpack.c.l.b16 %v1154
    %v1197 = vunpack.c.l.b16 %v1155
    %v1198 = vunpack.c.l.b16 %v1156
    %v1199 = vunpack.c.l.b16 %v1157
    %v1200 = vunpack.c.l.b16 %v1158
    %v1201 = vunpack.c.l.b16 %v1159
    %v1202 = vunpack.c.l.b16 %v1160
    %v1203 = vpack.c.b16 %v1183, %v1182
    %v1204 = vpack.c.b16 %v1185, %v1184
    %v1205 = vpack.c.b16 %v1187, %v1186
    %v1206 = vpack.c.b16 %v1189, %v1188
    %v1207 = vpack.c.b16 %v1191, %v1190
    %v1208 = vpack.c.b16 %v1193, %v1192
    %v1209 = vpack.c.b16 %v1195, %v1194
    %v1210 = vpack.c.b16 %v1197, %v1196
    %v1211 = vpack.c.b16 %v1199, %v1198
    %v1212 = vpack.c.b16 %v1201, %v1200
    %v1213 = vpack.c.b16 %v1202, %v1202
    %vm1224 = vcmask 277504
    %v1226 = vsel %vm1224, %v1133, 0
    %v1229 = vsel %vm1224, %v1135, 0
    %v1232 = vsel %vm1224, %v1137, 0
    %v1235 = vsel %vm1224, %v1139, 0
    %vm1237 = vcmask 1040384
    %v1239 = vsel %vm1237, %v1213, 0
    %1241 = vmatprep.subr.bf16.mxu0 0
    %1242 = vmatpush1.bf16.msra.mxu0 %v1210
    %1243 = vmatprep.subr.bf16.mxu0 0
    %1244 = vmatpush1.bf16.msra.mxu0 %v1209
    %1245 = vmatprep.subr.bf16.mxu0 0
    %1246 = vmatpush1.bf16.msra.mxu0 %v1208
    %1247 = vmatprep.subr.bf16.mxu0 0
    %1248 = vmatpush1.bf16.msra.mxu0 %v1207
    %1249 = vmatprep.subr.bf16.mxu0 0
    %1250 = vmatpush1.bf16.msra.mxu0 %v1206
    %1251 = vmatprep.subr.bf16.mxu0 0
    %1252 = vmatpush1.bf16.msra.mxu0 %v1205
    %1253 = vmatprep.subr.bf16.mxu0 0
    %1254 = vmatpush1.bf16.msra.mxu0 %v1204
    %1255 = vmatprep.subr.bf16.mxu0 0
    %1256 = vmatpush1.bf16.msra.mxu0 %v1203
    %1257 = vmatprep.subr.bf16.mxu0 0
    %1258 = vmatpush2.bf16.msra.mxu0 0
    %1259 = vmatprep.subr.bf16.mxu0 0
    %1260 = vmatpush2.bf16.msra.mxu0 0
    %1261 = vmatprep.subr.bf16.mxu0 0
    %1262 = vmatpush2.bf16.msra.mxu0 0
    %1263 = vmatprep.subr.bf16.mxu0 0
    %1264 = vmatpush2.bf16.msra.mxu0 0
    %1265 = vmatprep.subr.bf16.mxu0 0
    %1266 = vmatpush2.bf16.msra.mxu0 0
    %1267 = vmatprep.subr.bf16.mxu0 0
    %1268 = vmatpush2.bf16.msra.mxu0 %v1239
    %1269 = vmatprep.subr.bf16.mxu0 0
    %1270 = vmatpush2.bf16.msra.mxu0 %v1212
    %1271 = vmatprep.subr.bf16.mxu0 0
    %1272 = vmatpush2.bf16.msra.mxu0 %v1211
    %1273 = vmatprep.mubr.bf16.mxu0 %v1226
    %1274 = vmatmul.mubr.bf16.gmra.mxu0 %v1132
    %v1275 = vpop.f32.mrf.mxu0
    %v1276 = vadd.f32 0.0, %v1275
    %v1277 = vpop.f32.mrf.mxu0
    %v1278 = vpop.f32.mrf.mxu0
    %v1279 = vadd.f32 0.0, %v1278
    %v1280 = vpop.f32.mrf.mxu0
    %1281 = vmatprep.mubr.bf16.mxu0 %v1229
    %1282 = vmatmul.mubr.bf16.gmra.mxu0 %v1134
    %v1283 = vpop.f32.mrf.mxu0
    %v1284 = vadd.f32 0.0, %v1283
    %v1285 = vpop.f32.mrf.mxu0
    %v1286 = vpop.f32.mrf.mxu0
    %v1287 = vadd.f32 0.0, %v1286
    %v1288 = vpop.f32.mrf.mxu0
    %1289 = vmatprep.mubr.bf16.mxu0 %v1232
    %1290 = vmatmul.mubr.bf16.gmra.mxu0 %v1136
    %v1291 = vpop.f32.mrf.mxu0
    %v1292 = vadd.f32 0.0, %v1291
    %v1293 = vpop.f32.mrf.mxu0
    %v1294 = vpop.f32.mrf.mxu0
    %v1295 = vadd.f32 0.0, %v1294
    %v1296 = vpop.f32.mrf.mxu0
    %1297 = vmatprep.mubr.bf16.mxu0 %v1235
    %1298 = vmatmul.mubr.bf16.gmra.mxu0 %v1138
    %v1299 = vpop.f32.mrf.mxu0
    %v1300 = vadd.f32 0.0, %v1299
    %v1301 = vpop.f32.mrf.mxu0
    %v1302 = vpop.f32.mrf.mxu0
    %v1303 = vadd.f32 0.0, %v1302
    %v1304 = vpop.f32.mrf.mxu0
    %1305 = vdwg.mxu0
    %vm1306 = vcmask 687104
    %1307 = vst.msk [vmem:[#allocation2] sm:$0xff] %vm1306, %v1276
    %1308 = vst.msk [vmem:[#allocation2 + $0x8] sm:$0xff] %vm1306, %v1279
    %1309 = vst.msk [vmem:[#allocation2 + $0x10] sm:$0xff] %vm1306, %v1284
    %1310 = vst.msk [vmem:[#allocation2 + $0x18] sm:$0xff] %vm1306, %v1287
    %1311 = vst.msk [vmem:[#allocation2 + $0x20] sm:$0xff] %vm1306, %v1292
    %1312 = vst.msk [vmem:[#allocation2 + $0x28] sm:$0xff] %vm1306, %v1295
    %1313 = vst.msk [vmem:[#allocation2 + $0x30] sm:$0xff] %vm1306, %v1300
    %vm1314 = vcmask 683008
    %1315 = vst.msk [vmem:[#allocation2 + $0x38] sm:$0xf] %vm1314, %v1303
    %1316 = vst.msk [vmem:[#allocation2 + $0x3c] sm:$0xf] %vm1314, 0.0
    %v1317 = vld [vmem:[#allocation2] ss:$2 sm:$0xff]
    %s1318 = scalar_lea.vmem [#allocation2], 16
    %v1319 = vld [vmem:[%s1318] ss:$2 sm:$0xff]
    %s1320 = scalar_lea.vmem [#allocation2], 32
    %v1321 = vld [vmem:[%s1320] ss:$2 sm:$0xff]
    %s1322 = scalar_lea.vmem [#allocation2], 48
    %v1323 = vld [vmem:[%s1322] ss:$2 sm:$0xff]
    %s1324 = scalar_lea.vmem [#allocation2], 1
    %v1325 = vld [vmem:[%s1324] ss:$2 sm:$0xff]
    %s1326 = scalar_lea.vmem [#allocation2], 17
    %v1327 = vld [vmem:[%s1326] ss:$2 sm:$0xff]
    %s1328 = scalar_lea.vmem [#allocation2], 33
    %v1329 = vld [vmem:[%s1328] ss:$2 sm:$0xff]
    %s1330 = scalar_lea.vmem [#allocation2], 49
    %v1331 = vld [vmem:[%s1330] ss:$2 sm:$0xff]
    %v1332 = vmax.f32 %v1317, %v1325
    %v1333 = vmax.f32 %v1319, %v1327
    %v1334 = vmax.f32 %v1321, %v1329
    %v1335 = vmax.f32 %v1323, %v1331
    %v1336 = vpack.c.bf16 %v1333, %v1332
    %v1337 = vpack.c.bf16 %v1335, %v1334
    %v1340 = vunpack.c.l.b16 %v1336
    %v1341 = vunpack.c.h.b16 %v1336
    %v1342 = vunpack.c.l.b16 %v1337
    %v1343 = vunpack.c.h.b16 %v1337
    %v1344 = vpack.c.b16 %v1340, %v1340
    %v1345 = vpack.c.b16 %v1341, %v1341
    %v1346 = vpack.c.b16 %v1342, %v1342
    %v1347 = vpack.c.b16 %v1343, %v1343
    %1352 = vst.msk [vmem:[#allocation3] sm:$0xf] %vm1314, %v1344
    %1353 = vst.msk [vmem:[#allocation3 + $0x4] sm:$0xf] %vm1314, %v1345
    %1354 = vst.msk [vmem:[#allocation3 + $0x8] sm:$0xf] %vm1314, %v1346
    %1355 = vst.msk [vmem:[#allocation3 + $0xc] sm:$0xf] %vm1314, %v1347
    %v1356 = vld [vmem:[#allocation3] sm:$0xf]
    %v1357 = vld [vmem:[#allocation3 + $0x4] sm:$0xf]
    %v1358 = vld [vmem:[#allocation3 + $0x8] sm:$0xf]
    %v1359 = vld [vmem:[#allocation3 + $0xc] sm:$0x3]
    %v1360 = vld [vmem:[%s4] sm:$0xff]
    %v1361 = vld [vmem:[%s4 + $0x8] sm:$0xff]
    %v1362 = vld [vmem:[%s4 + $0x10] sm:$0xff]
    %v1363 = vld [vmem:[%s4 + $0x18] sm:$0xff]
    %v1364 = vld [vmem:[%s4 + $0x20] sm:$0xff]
    %v1365 = vld [vmem:[%s4 + $0x28] sm:$0xff]
    %v1366 = vld [vmem:[%s4 + $0x30] sm:$0xff]
    %v1367 = vld [vmem:[%s4 + $0x38] sm:$0xff]
    %v1368 = vld [vmem:[%s4 + $0x40] sm:$0xff]
    %v1369 = vld [vmem:[%s4 + $0x48] sm:$0xff]
    %v1370 = vld [vmem:[%s4 + $0x50] sm:$0x33]
    %v1371 = vld [vmem:[#allocation3 + $0xc] sm:$0x7]
    %s1372 = scalar_lea.vmem %s4, 88
    %v1373 = vld [vmem:[%s1372] sm:$0xff]
    %v1374 = vld [vmem:[%s1372 + $0x8] sm:$0xff]
    %v1375 = vld [vmem:[%s1372 + $0x10] sm:$0xff]
    %v1376 = vld [vmem:[%s1372 + $0x18] sm:$0xff]
    %v1377 = vld [vmem:[%s1372 + $0x20] sm:$0xff]
    %v1378 = vld [vmem:[%s1372 + $0x28] sm:$0xff]
    %v1379 = vld [vmem:[%s1372 + $0x30] sm:$0xff]
    %v1380 = vld [vmem:[%s1372 + $0x38] sm:$0xff]
    %v1381 = vld [vmem:[%s1372 + $0x40] sm:$0xff]
    %v1382 = vld [vmem:[%s1372 + $0x48] sm:$0xff]
    %v1383 = vld [vmem:[%s1372 + $0x50] sm:$0x33]
    %v1388 = vunpack.c.l.b16 %v1356
    %v1389 = vunpack.c.l.b16 %v1357
    %v1390 = vunpack.c.l.b16 %v1358
    %v1391 = vunpack.c.l.b16 %v1371
    %v1392 = vpack.c.b16 %v1389, %v1388
    %v1393 = vpack.c.b16 %v1391, %v1390
    %v1395 = vshrl.u32 %v1392, 16
    %v1397 = vshll.u32 %v1392, 16
    %v1399 = vrot.slane %v1397, 1
    %v1400 = vor.u32 %v1395, %v1399
    %v1402 = vshll.u32 %v1393, 16
    %v1404 = vrot.slane %v1402, 1
    %v1405 = vsel %vm100, %v1400, %v1404
    %v1406 = vshrl.u32 %v1393, 16
    %v1408 = vor.u32 %v1406, %v1404
    %v1420 = vunpack.c.l.b16 %v1373
    %v1421 = vunpack.c.h.b16 %v1373
    %v1422 = vunpack.c.l.b16 %v1374
    %v1423 = vunpack.c.h.b16 %v1374
    %v1424 = vunpack.c.l.b16 %v1375
    %v1425 = vunpack.c.h.b16 %v1375
    %v1426 = vunpack.c.l.b16 %v1376
    %v1427 = vunpack.c.h.b16 %v1376
    %v1428 = vunpack.c.l.b16 %v1377
    %v1429 = vunpack.c.h.b16 %v1377
    %v1430 = vunpack.c.l.b16 %v1378
    %v1431 = vunpack.c.h.b16 %v1378
    %v1432 = vunpack.c.l.b16 %v1379
    %v1433 = vunpack.c.h.b16 %v1379
    %v1434 = vunpack.c.l.b16 %v1380
    %v1435 = vunpack.c.h.b16 %v1380
    %v1436 = vunpack.c.l.b16 %v1381
    %v1437 = vunpack.c.h.b16 %v1381
    %v1438 = vunpack.c.l.b16 %v1382
    %v1439 = vunpack.c.h.b16 %v1382
    %v1440 = vunpack.c.l.b16 %v1383
    %v1441 = vunpack.c.h.b16 %v1383
    %v1442 = vpack.c.b16 %v1422, %v1420
    %v1443 = vpack.c.b16 %v1423, %v1421
    %v1444 = vpack.c.b16 %v1426, %v1424
    %v1445 = vpack.c.b16 %v1427, %v1425
    %v1446 = vpack.c.b16 %v1430, %v1428
    %v1447 = vpack.c.b16 %v1431, %v1429
    %v1448 = vpack.c.b16 %v1434, %v1432
    %v1449 = vpack.c.b16 %v1435, %v1433
    %v1450 = vpack.c.b16 %v1438, %v1436
    %v1451 = vpack.c.b16 %v1439, %v1437
    %v1452 = vpack.c.b16 %v1440, %v1440
    %v1453 = vpack.c.b16 %v1441, %v1441
    %v1465 = vsel %vm1306, %v1405, 0
    %v1468 = vsel %vm1306, %v1408, 0
    %vm1470 = vcmask 1041408
    %v1472 = vsel %vm1470, %v1452, 0
    %v1475 = vsel %vm1470, %v1453, 0
    %1477 = vmatprep.subr.bf16.mxu0 0
    %1478 = vmatpush1.bf16.msra.mxu0 0
    %1479 = vmatprep.subr.bf16.mxu0 0
    %1480 = vmatpush1.bf16.msra.mxu0 0
    %1481 = vmatprep.subr.bf16.mxu0 %v1475
    %1482 = vmatpush1.bf16.msra.mxu0 %v1472
    %1483 = vmatprep.subr.bf16.mxu0 %v1451
    %1484 = vmatpush1.bf16.msra.mxu0 %v1450
    %1485 = vmatprep.subr.bf16.mxu0 %v1449
    %1486 = vmatpush1.bf16.msra.mxu0 %v1448
    %1487 = vmatprep.subr.bf16.mxu0 %v1447
    %1488 = vmatpush1.bf16.msra.mxu0 %v1446
    %1489 = vmatprep.subr.bf16.mxu0 %v1445
    %1490 = vmatpush1.bf16.msra.mxu0 %v1444
    %1491 = vmatprep.subr.bf16.mxu0 %v1443
    %1492 = vmatpush1.bf16.msra.mxu0 %v1442
    %1493 = vmatprep.subr.bf16.mxu0 0
    %1494 = vmatpush2.bf16.msra.mxu0 0
    %1495 = vmatprep.subr.bf16.mxu0 0
    %1496 = vmatpush2.bf16.msra.mxu0 0
    %1497 = vmatprep.subr.bf16.mxu0 0
    %1498 = vmatpush2.bf16.msra.mxu0 0
    %1499 = vmatprep.subr.bf16.mxu0 0
    %1500 = vmatpush2.bf16.msra.mxu0 0
    %1501 = vmatprep.subr.bf16.mxu0 0
    %1502 = vmatpush2.bf16.msra.mxu0 0
    %1503 = vmatprep.subr.bf16.mxu0 0
    %1504 = vmatpush2.bf16.msra.mxu0 0
    %1505 = vmatprep.subr.bf16.mxu0 0
    %1506 = vmatpush2.bf16.msra.mxu0 0
    %1507 = vmatprep.subr.bf16.mxu0 0
    %1508 = vmatpush2.bf16.msra.mxu0 0
    %1509 = vmatprep.mubr.bf16.mxu0 0
    %1510 = vmatmul.mubr.bf16.gmra.mxu0 %v1465
    %v1511 = vpop.f32.mrf.mxu0
    %v1512 = vadd.f32 0.0, %v1511
    %v1513 = vpop.f32.mrf.mxu0
    %v1514 = vadd.f32 0.0, %v1513
    %v1515 = vpop.f32.mrf.mxu0
    %v1516 = vadd.f32 0.0, %v1515
    %v1517 = vpop.f32.mrf.mxu0
    %v1518 = vadd.f32 0.0, %v1517
    %1519 = vmatprep.mubr.bf16.mxu0 0
    %1520 = vmatmul.mubr.bf16.gmra.mxu0 %v1468
    %v1521 = vpop.f32.mrf.mxu0
    %v1522 = vadd.f32 0.0, %v1521
    %v1523 = vpop.f32.mrf.mxu0
    %v1524 = vadd.f32 0.0, %v1523
    %v1525 = vpop.f32.mrf.mxu0
    %v1526 = vadd.f32 0.0, %v1525
    %v1527 = vpop.f32.mrf.mxu0
    %v1528 = vadd.f32 0.0, %v1527
    %1529 = vdwg.mxu0
    %v1531 = vunpack.c.l.b16 %v1359
    %v1532 = vpack.c.b16 %v1531, %v1390
    %v1544 = vunpack.c.l.b16 %v1360
    %v1545 = vunpack.c.h.b16 %v1360
    %v1546 = vunpack.c.l.b16 %v1361
    %v1547 = vunpack.c.h.b16 %v1361
    %v1548 = vunpack.c.l.b16 %v1362
    %v1549 = vunpack.c.h.b16 %v1362
    %v1550 = vunpack.c.l.b16 %v1363
    %v1551 = vunpack.c.h.b16 %v1363
    %v1552 = vunpack.c.l.b16 %v1364
    %v1553 = vunpack.c.h.b16 %v1364
    %v1554 = vunpack.c.l.b16 %v1365
    %v1555 = vunpack.c.h.b16 %v1365
    %v1556 = vunpack.c.l.b16 %v1366
    %v1557 = vunpack.c.h.b16 %v1366
    %v1558 = vunpack.c.l.b16 %v1367
    %v1559 = vunpack.c.h.b16 %v1367
    %v1560 = vunpack.c.l.b16 %v1368
    %v1561 = vunpack.c.h.b16 %v1368
    %v1562 = vunpack.c.l.b16 %v1369
    %v1563 = vunpack.c.h.b16 %v1369
    %v1564 = vunpack.c.l.b16 %v1370
    %v1565 = vunpack.c.h.b16 %v1370
    %v1566 = vpack.c.b16 %v1546, %v1544
    %v1567 = vpack.c.b16 %v1547, %v1545
    %v1568 = vpack.c.b16 %v1550, %v1548
    %v1569 = vpack.c.b16 %v1551, %v1549
    %v1570 = vpack.c.b16 %v1554, %v1552
    %v1571 = vpack.c.b16 %v1555, %v1553
    %v1572 = vpack.c.b16 %v1558, %v1556
    %v1573 = vpack.c.b16 %v1559, %v1557
    %v1574 = vpack.c.b16 %v1562, %v1560
    %v1575 = vpack.c.b16 %v1563, %v1561
    %v1576 = vpack.c.b16 %v1564, %v1564
    %v1577 = vpack.c.b16 %v1565, %v1565
    %v1588 = vsel %vm1306, %v1392, 0
    %v1591 = vsel %vm1306, %v1532, 0
    %v1594 = vsel %vm1470, %v1576, 0
    %v1597 = vsel %vm1470, %v1577, 0
    %1599 = vmatprep.subr.bf16.mxu0 0
    %1600 = vmatpush1.bf16.msra.mxu0 0
    %1601 = vmatprep.subr.bf16.mxu0 0
    %1602 = vmatpush1.bf16.msra.mxu0 0
    %1603 = vmatprep.subr.bf16.mxu0 %v1597
    %1604 = vmatpush1.bf16.msra.mxu0 %v1594
    %1605 = vmatprep.subr.bf16.mxu0 %v1575
    %1606 = vmatpush1.bf16.msra.mxu0 %v1574
    %1607 = vmatprep.subr.bf16.mxu0 %v1573
    %1608 = vmatpush1.bf16.msra.mxu0 %v1572
    %1609 = vmatprep.subr.bf16.mxu0 %v1571
    %1610 = vmatpush1.bf16.msra.mxu0 %v1570
    %1611 = vmatprep.subr.bf16.mxu0 %v1569
    %1612 = vmatpush1.bf16.msra.mxu0 %v1568
    %1613 = vmatprep.subr.bf16.mxu0 %v1567
    %1614 = vmatpush1.bf16.msra.mxu0 %v1566
    %1615 = vmatprep.subr.bf16.mxu0 0
    %1616 = vmatpush2.bf16.msra.mxu0 0
    %1617 = vmatprep.subr.bf16.mxu0 0
    %1618 = vmatpush2.bf16.msra.mxu0 0
    %1619 = vmatprep.subr.bf16.mxu0 0
    %1620 = vmatpush2.bf16.msra.mxu0 0
    %1621 = vmatprep.subr.bf16.mxu0 0
    %1622 = vmatpush2.bf16.msra.mxu0 0
    %1623 = vmatprep.subr.bf16.mxu0 0
    %1624 = vmatpush2.bf16.msra.mxu0 0
    %1625 = vmatprep.subr.bf16.mxu0 0
    %1626 = vmatpush2.bf16.msra.mxu0 0
    %1627 = vmatprep.subr.bf16.mxu0 0
    %1628 = vmatpush2.bf16.msra.mxu0 0
    %1629 = vmatprep.subr.bf16.mxu0 0
    %1630 = vmatpush2.bf16.msra.mxu0 0
    %1631 = vmatprep.mubr.bf16.mxu0 0
    %1632 = vmatmul.mubr.bf16.gmra.mxu0 %v1588
    %v1633 = vpop.f32.mrf.mxu0
    %v1634 = vadd.f32 %v1512, %v1633
    %v1635 = vpop.f32.mrf.mxu0
    %v1636 = vadd.f32 %v1514, %v1635
    %v1637 = vpop.f32.mrf.mxu0
    %v1638 = vadd.f32 %v1516, %v1637
    %v1639 = vpop.f32.mrf.mxu0
    %v1640 = vadd.f32 %v1518, %v1639
    %1641 = vmatprep.mubr.bf16.mxu0 0
    %1642 = vmatmul.mubr.bf16.gmra.mxu0 %v1591
    %v1643 = vpop.f32.mrf.mxu0
    %v1644 = vadd.f32 %v1522, %v1643
    %v1645 = vpop.f32.mrf.mxu0
    %v1646 = vadd.f32 %v1524, %v1645
    %v1647 = vpop.f32.mrf.mxu0
    %v1648 = vadd.f32 %v1526, %v1647
    %v1649 = vpop.f32.mrf.mxu0
    %v1650 = vadd.f32 %v1528, %v1649
    %1651 = vdwg.mxu0
    %v1652 = vld [vmem:[#allocation3] sm:$0xe]
    %s1653 = scalar_lea.vmem %s4, 176
    %v1654 = vld [vmem:[%s1653] sm:$0xff]
    %v1655 = vld [vmem:[%s1653 + $0x8] sm:$0xff]
    %v1656 = vld [vmem:[%s1653 + $0x10] sm:$0xff]
    %v1657 = vld [vmem:[%s1653 + $0x18] sm:$0xff]
    %v1658 = vld [vmem:[%s1653 + $0x20] sm:$0xff]
    %v1659 = vld [vmem:[%s1653 + $0x28] sm:$0xff]
    %v1660 = vld [vmem:[%s1653 + $0x30] sm:$0xff]
    %v1661 = vld [vmem:[%s1653 + $0x38] sm:$0xff]
    %v1662 = vld [vmem:[%s1653 + $0x40] sm:$0xff]
    %v1663 = vld [vmem:[%s1653 + $0x48] sm:$0xff]
    %v1664 = vld [vmem:[%s1653 + $0x50] sm:$0x33]
    %v1666 = vunpack.c.l.b16 %v1652
    %v1667 = vpack.c.b16 %v1389, %v1666
    %v1668 = vrot.slane %v1667, 1
    %v1669 = vrot.slane %v1393, 1
    %v1670 = vsel %vm440, %v1668, %v1669
    %v1682 = vunpack.c.l.b16 %v1654
    %v1683 = vunpack.c.h.b16 %v1654
    %v1684 = vunpack.c.l.b16 %v1655
    %v1685 = vunpack.c.h.b16 %v1655
    %v1686 = vunpack.c.l.b16 %v1656
    %v1687 = vunpack.c.h.b16 %v1656
    %v1688 = vunpack.c.l.b16 %v1657
    %v1689 = vunpack.c.h.b16 %v1657
    %v1690 = vunpack.c.l.b16 %v1658
    %v1691 = vunpack.c.h.b16 %v1658
    %v1692 = vunpack.c.l.b16 %v1659
    %v1693 = vunpack.c.h.b16 %v1659
    %v1694 = vunpack.c.l.b16 %v1660
    %v1695 = vunpack.c.h.b16 %v1660
    %v1696 = vunpack.c.l.b16 %v1661
    %v1697 = vunpack.c.h.b16 %v1661
    %v1698 = vunpack.c.l.b16 %v1662
    %v1699 = vunpack.c.h.b16 %v1662
    %v1700 = vunpack.c.l.b16 %v1663
    %v1701 = vunpack.c.h.b16 %v1663
    %v1702 = vunpack.c.l.b16 %v1664
    %v1703 = vunpack.c.h.b16 %v1664
    %v1704 = vpack.c.b16 %v1684, %v1682
    %v1705 = vpack.c.b16 %v1685, %v1683
    %v1706 = vpack.c.b16 %v1688, %v1686
    %v1707 = vpack.c.b16 %v1689, %v1687
    %v1708 = vpack.c.b16 %v1692, %v1690
    %v1709 = vpack.c.b16 %v1693, %v1691
    %v1710 = vpack.c.b16 %v1696, %v1694
    %v1711 = vpack.c.b16 %v1697, %v1695
    %v1712 = vpack.c.b16 %v1700, %v1698
    %v1713 = vpack.c.b16 %v1701, %v1699
    %v1714 = vpack.c.b16 %v1702, %v1702
    %v1715 = vpack.c.b16 %v1703, %v1703
    %v1727 = vsel %vm1306, %v1670, 0
    %v1730 = vsel %vm1306, %v1669, 0
    %v1733 = vsel %vm1470, %v1714, 0
    %v1736 = vsel %vm1470, %v1715, 0
    %1738 = vmatprep.subr.bf16.mxu0 0
    %1739 = vmatpush1.bf16.msra.mxu0 0
    %1740 = vmatprep.subr.bf16.mxu0 0
    %1741 = vmatpush1.bf16.msra.mxu0 0
    %1742 = vmatprep.subr.bf16.mxu0 %v1736
    %1743 = vmatpush1.bf16.msra.mxu0 %v1733
    %1744 = vmatprep.subr.bf16.mxu0 %v1713
    %1745 = vmatpush1.bf16.msra.mxu0 %v1712
    %1746 = vmatprep.subr.bf16.mxu0 %v1711
    %1747 = vmatpush1.bf16.msra.mxu0 %v1710
    %1748 = vmatprep.subr.bf16.mxu0 %v1709
    %1749 = vmatpush1.bf16.msra.mxu0 %v1708
    %1750 = vmatprep.subr.bf16.mxu0 %v1707
    %1751 = vmatpush1.bf16.msra.mxu0 %v1706
    %1752 = vmatprep.subr.bf16.mxu0 %v1705
    %1753 = vmatpush1.bf16.msra.mxu0 %v1704
    %1754 = vmatprep.subr.bf16.mxu0 0
    %1755 = vmatpush2.bf16.msra.mxu0 0
    %1756 = vmatprep.subr.bf16.mxu0 0
    %1757 = vmatpush2.bf16.msra.mxu0 0
    %1758 = vmatprep.subr.bf16.mxu0 0
    %1759 = vmatpush2.bf16.msra.mxu0 0
    %1760 = vmatprep.subr.bf16.mxu0 0
    %1761 = vmatpush2.bf16.msra.mxu0 0
    %1762 = vmatprep.subr.bf16.mxu0 0
    %1763 = vmatpush2.bf16.msra.mxu0 0
    %1764 = vmatprep.subr.bf16.mxu0 0
    %1765 = vmatpush2.bf16.msra.mxu0 0
    %1766 = vmatprep.subr.bf16.mxu0 0
    %1767 = vmatpush2.bf16.msra.mxu0 0
    %1768 = vmatprep.subr.bf16.mxu0 0
    %1769 = vmatpush2.bf16.msra.mxu0 0
    %1770 = vmatprep.mubr.bf16.mxu0 0
    %1771 = vmatmul.mubr.bf16.gmra.mxu0 %v1727
    %v1772 = vpop.f32.mrf.mxu0
    %v1773 = vadd.f32 0.0, %v1772
    %v1774 = vpop.f32.mrf.mxu0
    %v1775 = vadd.f32 0.0, %v1774
    %v1776 = vpop.f32.mrf.mxu0
    %v1777 = vadd.f32 0.0, %v1776
    %v1778 = vpop.f32.mrf.mxu0
    %v1779 = vadd.f32 0.0, %v1778
    %1780 = vmatprep.mubr.bf16.mxu0 0
    %1781 = vmatmul.mubr.bf16.gmra.mxu0 %v1730
    %v1782 = vpop.f32.mrf.mxu0
    %v1783 = vadd.f32 0.0, %v1782
    %v1784 = vpop.f32.mrf.mxu0
    %v1785 = vadd.f32 0.0, %v1784
    %v1786 = vpop.f32.mrf.mxu0
    %v1787 = vadd.f32 0.0, %v1786
    %v1788 = vpop.f32.mrf.mxu0
    %v1789 = vadd.f32 0.0, %v1788
    %1790 = vdwg.mxu0
    %v1791 = vadd.f32 %v1634, %v1773
    %v1792 = vadd.f32 %v1636, %v1775
    %v1793 = vadd.f32 %v1638, %v1777
    %v1794 = vadd.f32 %v1640, %v1779
    %v1795 = vadd.f32 %v1644, %v1783
    %v1796 = vadd.f32 %v1646, %v1785
    %v1797 = vadd.f32 %v1648, %v1787
    %v1798 = vadd.f32 %v1650, %v1789
    %v1799 = vld [vmem:[#allocation3 + $0xc] sm:$0xf]
    %s1800 = scalar_lea.vmem %s4, 264
    %v1801 = vld [vmem:[%s1800] sm:$0xff]
    %v1802 = vld [vmem:[%s1800 + $0x8] sm:$0xff]
    %v1803 = vld [vmem:[%s1800 + $0x10] sm:$0xff]
    %v1804 = vld [vmem:[%s1800 + $0x18] sm:$0xff]
    %v1805 = vld [vmem:[%s1800 + $0x20] sm:$0xff]
    %v1806 = vld [vmem:[%s1800 + $0x28] sm:$0xff]
    %v1807 = vld [vmem:[%s1800 + $0x30] sm:$0xff]
    %v1808 = vld [vmem:[%s1800 + $0x38] sm:$0xff]
    %v1809 = vld [vmem:[%s1800 + $0x40] sm:$0xff]
    %v1810 = vld [vmem:[%s1800 + $0x48] sm:$0xff]
    %v1811 = vld [vmem:[%s1800 + $0x50] sm:$0x33]
    %v1813 = vunpack.c.l.b16 %v1799
    %v1814 = vpack.c.b16 %v1813, %v1390
    %v1816 = vshrl.u32 %v1667, 16
    %v1818 = vrot.slane %v1816, 1
    %v1819 = vshll.u32 %v1667, 16
    %v1821 = vrot.slane %v1819, 2
    %v1822 = vor.u32 %v1818, %v1821
    %v1824 = vshrl.u32 %v1814, 16
    %v1826 = vrot.slane %v1824, 1
    %v1827 = vshll.u32 %v1814, 16
    %v1829 = vrot.slane %v1827, 2
    %v1830 = vor.u32 %v1826, %v1829
    %v1831 = vsel %vm626, %v1822, %v1830
    %v1843 = vunpack.c.l.b16 %v1801
    %v1844 = vunpack.c.h.b16 %v1801
    %v1845 = vunpack.c.l.b16 %v1802
    %v1846 = vunpack.c.h.b16 %v1802
    %v1847 = vunpack.c.l.b16 %v1803
    %v1848 = vunpack.c.h.b16 %v1803
    %v1849 = vunpack.c.l.b16 %v1804
    %v1850 = vunpack.c.h.b16 %v1804
    %v1851 = vunpack.c.l.b16 %v1805
    %v1852 = vunpack.c.h.b16 %v1805
    %v1853 = vunpack.c.l.b16 %v1806
    %v1854 = vunpack.c.h.b16 %v1806
    %v1855 = vunpack.c.l.b16 %v1807
    %v1856 = vunpack.c.h.b16 %v1807
    %v1857 = vunpack.c.l.b16 %v1808
    %v1858 = vunpack.c.h.b16 %v1808
    %v1859 = vunpack.c.l.b16 %v1809
    %v1860 = vunpack.c.h.b16 %v1809
    %v1861 = vunpack.c.l.b16 %v1810
    %v1862 = vunpack.c.h.b16 %v1810
    %v1863 = vunpack.c.l.b16 %v1811
    %v1864 = vunpack.c.h.b16 %v1811
    %v1865 = vpack.c.b16 %v1845, %v1843
    %v1866 = vpack.c.b16 %v1846, %v1844
    %v1867 = vpack.c.b16 %v1849, %v1847
    %v1868 = vpack.c.b16 %v1850, %v1848
    %v1869 = vpack.c.b16 %v1853, %v1851
    %v1870 = vpack.c.b16 %v1854, %v1852
    %v1871 = vpack.c.b16 %v1857, %v1855
    %v1872 = vpack.c.b16 %v1858, %v1856
    %v1873 = vpack.c.b16 %v1861, %v1859
    %v1874 = vpack.c.b16 %v1862, %v1860
    %v1875 = vpack.c.b16 %v1863, %v1863
    %v1876 = vpack.c.b16 %v1864, %v1864
    %v1888 = vsel %vm1306, %v1831, 0
    %v1891 = vsel %vm1306, %v1830, 0
    %v1894 = vsel %vm1470, %v1875, 0
    %v1897 = vsel %vm1470, %v1876, 0
    %1899 = vmatprep.subr.bf16.mxu0 0
    %1900 = vmatpush1.bf16.msra.mxu0 0
    %1901 = vmatprep.subr.bf16.mxu0 0
    %1902 = vmatpush1.bf16.msra.mxu0 0
    %1903 = vmatprep.subr.bf16.mxu0 %v1897
    %1904 = vmatpush1.bf16.msra.mxu0 %v1894
    %1905 = vmatprep.subr.bf16.mxu0 %v1874
    %1906 = vmatpush1.bf16.msra.mxu0 %v1873
    %1907 = vmatprep.subr.bf16.mxu0 %v1872
    %1908 = vmatpush1.bf16.msra.mxu0 %v1871
    %1909 = vmatprep.subr.bf16.mxu0 %v1870
    %1910 = vmatpush1.bf16.msra.mxu0 %v1869
    %1911 = vmatprep.subr.bf16.mxu0 %v1868
    %1912 = vmatpush1.bf16.msra.mxu0 %v1867
    %1913 = vmatprep.subr.bf16.mxu0 %v1866
    %1914 = vmatpush1.bf16.msra.mxu0 %v1865
    %1915 = vmatprep.subr.bf16.mxu0 0
    %1916 = vmatpush2.bf16.msra.mxu0 0
    %1917 = vmatprep.subr.bf16.mxu0 0
    %1918 = vmatpush2.bf16.msra.mxu0 0
    %1919 = vmatprep.subr.bf16.mxu0 0
    %1920 = vmatpush2.bf16.msra.mxu0 0
    %1921 = vmatprep.subr.bf16.mxu0 0
    %1922 = vmatpush2.bf16.msra.mxu0 0
    %1923 = vmatprep.subr.bf16.mxu0 0
    %1924 = vmatpush2.bf16.msra.mxu0 0
    %1925 = vmatprep.subr.bf16.mxu0 0
    %1926 = vmatpush2.bf16.msra.mxu0 0
    %1927 = vmatprep.subr.bf16.mxu0 0
    %1928 = vmatpush2.bf16.msra.mxu0 0
    %1929 = vmatprep.subr.bf16.mxu0 0
    %1930 = vmatpush2.bf16.msra.mxu0 0
    %1931 = vmatprep.mubr.bf16.mxu0 0
    %1932 = vmatmul.mubr.bf16.gmra.mxu0 %v1888
    %v1933 = vpop.f32.mrf.mxu0
    %v1934 = vadd.f32 0.0, %v1933
    %v1935 = vpop.f32.mrf.mxu0
    %v1936 = vadd.f32 0.0, %v1935
    %v1937 = vpop.f32.mrf.mxu0
    %v1938 = vadd.f32 0.0, %v1937
    %v1939 = vpop.f32.mrf.mxu0
    %v1940 = vadd.f32 0.0, %v1939
    %1941 = vmatprep.mubr.bf16.mxu0 0
    %1942 = vmatmul.mubr.bf16.gmra.mxu0 %v1891
    %v1943 = vpop.f32.mrf.mxu0
    %v1944 = vadd.f32 0.0, %v1943
    %v1945 = vpop.f32.mrf.mxu0
    %v1946 = vadd.f32 0.0, %v1945
    %v1947 = vpop.f32.mrf.mxu0
    %v1948 = vadd.f32 0.0, %v1947
    %v1949 = vpop.f32.mrf.mxu0
    %v1950 = vadd.f32 0.0, %v1949
    %1951 = vdwg.mxu0
    %v1952 = vadd.f32 %v1791, %v1934
    %v1953 = vadd.f32 %v1792, %v1936
    %v1954 = vadd.f32 %v1793, %v1938
    %v1955 = vadd.f32 %v1794, %v1940
    %v1956 = vadd.f32 %v1795, %v1944
    %v1957 = vadd.f32 %v1796, %v1946
    %v1958 = vadd.f32 %v1797, %v1948
    %v1959 = vadd.f32 %v1798, %v1950
    %v1960 = vld [vmem:[#allocation3] sm:$0xc]
    %s1961 = scalar_lea.vmem %s4, 352
    %v1962 = vld [vmem:[%s1961] sm:$0xff]
    %v1963 = vld [vmem:[%s1961 + $0x8] sm:$0xff]
    %v1964 = vld [vmem:[%s1961 + $0x10] sm:$0xff]
    %v1965 = vld [vmem:[%s1961 + $0x18] sm:$0xff]
    %v1966 = vld [vmem:[%s1961 + $0x20] sm:$0xff]
    %v1967 = vld [vmem:[%s1961 + $0x28] sm:$0xff]
    %v1968 = vld [vmem:[%s1961 + $0x30] sm:$0xff]
    %v1969 = vld [vmem:[%s1961 + $0x38] sm:$0xff]
    %v1970 = vld [vmem:[%s1961 + $0x40] sm:$0xff]
    %v1971 = vld [vmem:[%s1961 + $0x48] sm:$0xff]
    %v1972 = vld [vmem:[%s1961 + $0x50] sm:$0x33]
    %v1974 = vunpack.c.l.b16 %v1960
    %v1975 = vpack.c.b16 %v1389, %v1974
    %v1976 = vrot.slane %v1975, 2
    %v1977 = vrot.slane %v1814, 2
    %v1978 = vsel %vm830, %v1976, %v1977
    %v1990 = vunpack.c.l.b16 %v1962
    %v1991 = vunpack.c.h.b16 %v1962
    %v1992 = vunpack.c.l.b16 %v1963
    %v1993 = vunpack.c.h.b16 %v1963
    %v1994 = vunpack.c.l.b16 %v1964
    %v1995 = vunpack.c.h.b16 %v1964
    %v1996 = vunpack.c.l.b16 %v1965
    %v1997 = vunpack.c.h.b16 %v1965
    %v1998 = vunpack.c.l.b16 %v1966
    %v1999 = vunpack.c.h.b16 %v1966
    %v2000 = vunpack.c.l.b16 %v1967
    %v2001 = vunpack.c.h.b16 %v1967
    %v2002 = vunpack.c.l.b16 %v1968
    %v2003 = vunpack.c.h.b16 %v1968
    %v2004 = vunpack.c.l.b16 %v1969
    %v2005 = vunpack.c.h.b16 %v1969
    %v2006 = vunpack.c.l.b16 %v1970
    %v2007 = vunpack.c.h.b16 %v1970
    %v2008 = vunpack.c.l.b16 %v1971
    %v2009 = vunpack.c.h.b16 %v1971
    %v2010 = vunpack.c.l.b16 %v1972
    %v2011 = vunpack.c.h.b16 %v1972
    %v2012 = vpack.c.b16 %v1992, %v1990
    %v2013 = vpack.c.b16 %v1993, %v1991
    %v2014 = vpack.c.b16 %v1996, %v1994
    %v2015 = vpack.c.b16 %v1997, %v1995
    %v2016 = vpack.c.b16 %v2000, %v1998
    %v2017 = vpack.c.b16 %v2001, %v1999
    %v2018 = vpack.c.b16 %v2004, %v2002
    %v2019 = vpack.c.b16 %v2005, %v2003
    %v2020 = vpack.c.b16 %v2008, %v2006
    %v2021 = vpack.c.b16 %v2009, %v2007
    %v2022 = vpack.c.b16 %v2010, %v2010
    %v2023 = vpack.c.b16 %v2011, %v2011
    %v2035 = vsel %vm1306, %v1978, 0
    %v2038 = vsel %vm1306, %v1977, 0
    %v2041 = vsel %vm1470, %v2022, 0
    %v2044 = vsel %vm1470, %v2023, 0
    %2046 = vmatprep.subr.bf16.mxu0 0
    %2047 = vmatpush1.bf16.msra.mxu0 0
    %2048 = vmatprep.subr.bf16.mxu0 0
    %2049 = vmatpush1.bf16.msra.mxu0 0
    %2050 = vmatprep.subr.bf16.mxu0 %v2044
    %2051 = vmatpush1.bf16.msra.mxu0 %v2041
    %2052 = vmatprep.subr.bf16.mxu0 %v2021
    %2053 = vmatpush1.bf16.msra.mxu0 %v2020
    %2054 = vmatprep.subr.bf16.mxu0 %v2019
    %2055 = vmatpush1.bf16.msra.mxu0 %v2018
    %2056 = vmatprep.subr.bf16.mxu0 %v2017
    %2057 = vmatpush1.bf16.msra.mxu0 %v2016
    %2058 = vmatprep.subr.bf16.mxu0 %v2015
    %2059 = vmatpush1.bf16.msra.mxu0 %v2014
    %2060 = vmatprep.subr.bf16.mxu0 %v2013
    %2061 = vmatpush1.bf16.msra.mxu0 %v2012
    %2062 = vmatprep.subr.bf16.mxu0 0
    %2063 = vmatpush2.bf16.msra.mxu0 0
    %2064 = vmatprep.subr.bf16.mxu0 0
    %2065 = vmatpush2.bf16.msra.mxu0 0
    %2066 = vmatprep.subr.bf16.mxu0 0
    %2067 = vmatpush2.bf16.msra.mxu0 0
    %2068 = vmatprep.subr.bf16.mxu0 0
    %2069 = vmatpush2.bf16.msra.mxu0 0
    %2070 = vmatprep.subr.bf16.mxu0 0
    %2071 = vmatpush2.bf16.msra.mxu0 0
    %2072 = vmatprep.subr.bf16.mxu0 0
    %2073 = vmatpush2.bf16.msra.mxu0 0
    %2074 = vmatprep.subr.bf16.mxu0 0
    %2075 = vmatpush2.bf16.msra.mxu0 0
    %2076 = vmatprep.subr.bf16.mxu0 0
    %2077 = vmatpush2.bf16.msra.mxu0 0
    %2078 = vmatprep.mubr.bf16.mxu0 0
    %2079 = vmatmul.mubr.bf16.gmra.mxu0 %v2035
    %v2080 = vpop.f32.mrf.mxu0
    %v2081 = vadd.f32 0.0, %v2080
    %v2082 = vpop.f32.mrf.mxu0
    %v2083 = vadd.f32 0.0, %v2082
    %v2084 = vpop.f32.mrf.mxu0
    %v2085 = vadd.f32 0.0, %v2084
    %v2086 = vpop.f32.mrf.mxu0
    %v2087 = vadd.f32 0.0, %v2086
    %2088 = vmatprep.mubr.bf16.mxu0 0
    %2089 = vmatmul.mubr.bf16.gmra.mxu0 %v2038
    %v2090 = vpop.f32.mrf.mxu0
    %v2091 = vadd.f32 0.0, %v2090
    %v2092 = vpop.f32.mrf.mxu0
    %v2093 = vadd.f32 0.0, %v2092
    %v2094 = vpop.f32.mrf.mxu0
    %v2095 = vadd.f32 0.0, %v2094
    %v2096 = vpop.f32.mrf.mxu0
    %v2097 = vadd.f32 0.0, %v2096
    %2098 = vdwg.mxu0
    %v2099 = vadd.f32 %v1952, %v2081
    %v2100 = vadd.f32 %v1953, %v2083
    %v2101 = vadd.f32 %v1954, %v2085
    %v2102 = vadd.f32 %v1955, %v2087
    %v2103 = vadd.f32 %v1956, %v2091
    %v2104 = vadd.f32 %v1957, %v2093
    %v2105 = vadd.f32 %v1958, %v2095
    %v2106 = vadd.f32 %v1959, %v2097
    %v2107 = vld [vmem:[%s5] sm:$0x3]
    %v2109 = vlaneseq
    %v2110 = vshrl.u32 %v2109, 7
    %v2111 = vsub.s32 0, %v2110
    %v2112 = vrot.slane %v2107, %v2111
    %v2113 = vlaneseq
    %v2114 = vshrl.u32 %v2113, 7
    %v2115 = vsub.s32 1, %v2114
    %v2116 = vrot.slane %v2107, %v2115
    %v2119 = vadd.f32 %v2099, %v2112
    %v2120 = vadd.f32 %v2100, %v2116
    %v2121 = vadd.f32 %v2101, %v2112
    %v2122 = vadd.f32 %v2102, %v2116
    %v2123 = vadd.f32 %v2103, %v2112
    %v2124 = vadd.f32 %v2104, %v2116
    %v2125 = vadd.f32 %v2105, %v2112
    %v2126 = vadd.f32 %v2106, %v2116
    %v2127 = vmax.f32 %v2119, 0.0
    %v2128 = vmax.f32 %v2120, 0.0
    %v2129 = vmax.f32 %v2121, 0.0
    %v2130 = vmax.f32 %v2122, 0.0
    %v2131 = vmax.f32 %v2123, 0.0
    %v2132 = vmax.f32 %v2124, 0.0
    %v2133 = vmax.f32 %v2125, 0.0
    %v2134 = vmax.f32 %v2126, 0.0
    %2143 = vrot.lane.b32.xlu0 %v2127, 112
    %v2144 = vpop.permute.xlu0 %2143
    %2145 = vrot.lane.b32.xlu0 %v2128, 112
    %v2146 = vpop.permute.xlu0 %2145
    %2147 = vrot.lane.b32.xlu0 %v2129, 112
    %v2148 = vpop.permute.xlu0 %2147
    %2149 = vrot.lane.b32.xlu0 %v2130, 112
    %v2150 = vpop.permute.xlu0 %2149
    %2151 = vrot.lane.b32.xlu0 %v2131, 112
    %v2152 = vpop.permute.xlu0 %2151
    %2153 = vrot.lane.b32.xlu0 %v2132, 112
    %v2154 = vpop.permute.xlu0 %2153
    %2155 = vrot.lane.b32.xlu0 %v2133, 112
    %v2156 = vpop.permute.xlu0 %2155
    %2157 = vrot.lane.b32.xlu0 %v2134, 112
    %v2158 = vpop.permute.xlu0 %2157
    %vm2159 = vcmask 916480
    %v2160 = vsel %vm2159, %v2144, %v2146
    %v2161 = vsel %vm2159, %v2148, %v2150
    %v2162 = vsel %vm2159, %v2152, %v2154
    %v2163 = vsel %vm2159, %v2156, %v2158
    %v2172 = vmax.f32 %v2127, %v2160
    %v2173 = vmax.f32 %v2128, %v2146
    %v2174 = vmax.f32 %v2129, %v2161
    %v2175 = vmax.f32 %v2130, %v2150
    %v2176 = vmax.f32 %v2131, %v2162
    %v2177 = vmax.f32 %v2132, %v2154
    %v2178 = vmax.f32 %v2133, %v2163
    %v2179 = vmax.f32 %v2134, %v2158
    %v2180 = vpack.c.bf16 %v2174, %v2172
    %v2181 = vpack.c.bf16 %v2175, %v2173
    %v2182 = vpack.c.bf16 %v2178, %v2176
    %v2183 = vpack.c.bf16 %v2179, %v2177
    %v2184 = vld [vmem:[%s6] sm:$0xf]
    %v2185 = vld [vmem:[%s6 + $0x4] sm:$0xf]
    %v2186 = vld [vmem:[%s6 + $0x8] sm:$0xf]
    %v2187 = vld [vmem:[%s6 + $0xc] sm:$0xf]
    %v2188 = vld [vmem:[%s6 + $0x10] sm:$0xf]
    %v2189 = vld [vmem:[%s6 + $0x14] sm:$0xf]
    %v2190 = vld [vmem:[%s6 + $0x18] sm:$0xf]
    %v2191 = vld [vmem:[%s6 + $0x1c] sm:$0xf]
    %v2192 = vld [vmem:[%s6 + $0x20] sm:$0xf]
    %v2193 = vld [vmem:[%s6 + $0x24] sm:$0xf]
    %v2194 = vld [vmem:[%s6 + $0x28] sm:$0xf]
    %v2195 = vld [vmem:[%s6 + $0x2c] sm:$0xf]
    %v2196 = vld [vmem:[%s6 + $0x30] sm:$0xf]
    %v2197 = vld [vmem:[%s6 + $0x34] sm:$0xf]
    %v2198 = vld [vmem:[%s6 + $0x38] sm:$0xf]
    %v2199 = vld [vmem:[%s6 + $0x3c] sm:$0xf]
    %v2200 = vld [vmem:[%s6 + $0x40] sm:$0xf]
    %v2201 = vld [vmem:[%s6 + $0x44] sm:$0xf]
    %v2220 = vunpack.c.l.b16 %v2184
    %v2221 = vunpack.c.l.b16 %v2185
    %v2222 = vunpack.c.l.b16 %v2186
    %v2223 = vunpack.c.l.b16 %v2187
    %v2224 = vunpack.c.l.b16 %v2188
    %v2225 = vunpack.c.l.b16 %v2189
    %v2226 = vunpack.c.l.b16 %v2190
    %v2227 = vunpack.c.l.b16 %v2191
    %v2228 = vunpack.c.l.b16 %v2192
    %v2229 = vunpack.c.l.b16 %v2193
    %v2230 = vunpack.c.l.b16 %v2194
    %v2231 = vunpack.c.l.b16 %v2195
    %v2232 = vunpack.c.l.b16 %v2196
    %v2233 = vunpack.c.l.b16 %v2197
    %v2234 = vunpack.c.l.b16 %v2198
    %v2235 = vunpack.c.l.b16 %v2199
    %v2236 = vunpack.c.l.b16 %v2200
    %v2237 = vunpack.c.l.b16 %v2201
    %v2238 = vpack.c.b16 %v2221, %v2220
    %v2239 = vpack.c.b16 %v2223, %v2222
    %v2240 = vpack.c.b16 %v2225, %v2224
    %v2241 = vpack.c.b16 %v2227, %v2226
    %v2242 = vpack.c.b16 %v2229, %v2228
    %v2243 = vpack.c.b16 %v2231, %v2230
    %v2244 = vpack.c.b16 %v2233, %v2232
    %v2245 = vpack.c.b16 %v2235, %v2234
    %v2246 = vpack.c.b16 %v2237, %v2236
    %vm2256 = vcmask 130048
    %v2258 = vsel %vm2256, %v2181, 0
    %v2261 = vsel %vm2256, %v2183, 0
    %2263 = vmatprep.subr.bf16.mxu0 0
    %2264 = vmatpush1.bf16.msra.mxu0 %v2245
    %2265 = vmatprep.subr.bf16.mxu0 0
    %2266 = vmatpush1.bf16.msra.mxu0 %v2244
    %2267 = vmatprep.subr.bf16.mxu0 0
    %2268 = vmatpush1.bf16.msra.mxu0 %v2243
    %2269 = vmatprep.subr.bf16.mxu0 0
    %2270 = vmatpush1.bf16.msra.mxu0 %v2242
    %2271 = vmatprep.subr.bf16.mxu0 0
    %2272 = vmatpush1.bf16.msra.mxu0 %v2241
    %2273 = vmatprep.subr.bf16.mxu0 0
    %2274 = vmatpush1.bf16.msra.mxu0 %v2240
    %2275 = vmatprep.subr.bf16.mxu0 0
    %2276 = vmatpush1.bf16.msra.mxu0 %v2239
    %2277 = vmatprep.subr.bf16.mxu0 0
    %2278 = vmatpush1.bf16.msra.mxu0 %v2238
    %2279 = vmatprep.subr.bf16.mxu0 0
    %2280 = vmatpush2.bf16.msra.mxu0 0
    %2281 = vmatprep.subr.bf16.mxu0 0
    %2282 = vmatpush2.bf16.msra.mxu0 0
    %2283 = vmatprep.subr.bf16.mxu0 0
    %2284 = vmatpush2.bf16.msra.mxu0 0
    %2285 = vmatprep.subr.bf16.mxu0 0
    %2286 = vmatpush2.bf16.msra.mxu0 0
    %2287 = vmatprep.subr.bf16.mxu0 0
    %2288 = vmatpush2.bf16.msra.mxu0 0
    %2289 = vmatprep.subr.bf16.mxu0 0
    %2290 = vmatpush2.bf16.msra.mxu0 0
    %2291 = vmatprep.subr.bf16.mxu0 0
    %2292 = vmatpush2.bf16.msra.mxu0 0
    %2293 = vmatprep.subr.bf16.mxu0 0
    %2294 = vmatpush2.bf16.msra.mxu0 %v2246
    %2295 = vmatprep.mubr.bf16.mxu0 %v2258
    %2296 = vmatmul.mubr.bf16.gmra.mxu0 %v2180
    %v2297 = vpop.f32.mrf.mxu0
    %v2298 = vadd.f32 0.0, %v2297
    %v2299 = vpop.f32.mrf.mxu0
    %v2300 = vpop.f32.mrf.mxu0
    %v2301 = vadd.f32 0.0, %v2300
    %v2302 = vpop.f32.mrf.mxu0
    %2303 = vmatprep.mubr.bf16.mxu0 %v2261
    %2304 = vmatmul.mubr.bf16.gmra.mxu0 %v2182
    %v2305 = vpop.f32.mrf.mxu0
    %v2306 = vadd.f32 0.0, %v2305
    %v2307 = vpop.f32.mrf.mxu0
    %v2308 = vpop.f32.mrf.mxu0
    %v2309 = vadd.f32 0.0, %v2308
    %v2310 = vpop.f32.mrf.mxu0
    %2311 = vdwg.mxu0
    %vm2312 = vcmask 654336
    %2313 = vst.msk [vmem:[#allocation4] sm:$0xff] %vm2312, %v2298
    %2314 = vst.msk [vmem:[#allocation4 + $0x8] sm:$0xff] %vm2312, %v2301
    %2315 = vst.msk [vmem:[#allocation4 + $0x10] sm:$0xff] %vm2312, %v2306
    %vm2316 = vcmask 650240
    %2317 = vst.msk [vmem:[#allocation4 + $0x18] sm:$0xf] %vm2316, %v2309
    %v2318 = vld [vmem:[#allocation4] ss:$16 sm:$0x3]
    %s2319 = scalar_lea.vmem [#allocation4], 1
    %v2320 = vld [vmem:[%s2319] ss:$16 sm:$0x3]
    %v2321 = vmax.f32 %v2318, %v2320
    %s2322 = scalar_lea.vmem [#allocation4], 2
    %v2323 = vld [vmem:[%s2322] ss:$16 sm:$0x3]
    %s2324 = scalar_lea.vmem [#allocation4], 3
    %v2325 = vld [vmem:[%s2324] ss:$16 sm:$0x3]
    %v2326 = vmax.f32 %v2323, %v2325
    %s2327 = scalar_lea.vmem [#allocation4], 4
    %v2328 = vld [vmem:[%s2327] ss:$16 sm:$0x3]
    %s2329 = scalar_lea.vmem [#allocation4], 5
    %v2330 = vld [vmem:[%s2329] ss:$16 sm:$0x3]
    %v2331 = vmax.f32 %v2328, %v2330
    %s2332 = scalar_lea.vmem [#allocation4], 6
    %v2333 = vld [vmem:[%s2332] ss:$16 sm:$0x3]
    %s2334 = scalar_lea.vmem [#allocation4], 7
    %v2335 = vld [vmem:[%s2334] ss:$16 sm:$0x3]
    %v2336 = vmax.f32 %v2333, %v2335
    %s2337 = scalar_lea.vmem [#allocation4], 8
    %v2338 = vld [vmem:[%s2337] ss:$16 sm:$0x3]
    %s2339 = scalar_lea.vmem [#allocation4], 9
    %v2340 = vld [vmem:[%s2339] ss:$16 sm:$0x3]
    %v2341 = vmax.f32 %v2338, %v2340
    %2343 = vrot.lane.b32.xlu0 %v2326, 80
    %v2344 = vpop.permute.xlu0 %2343
    %2347 = vrot.lane.b32.xlu0 %v2331, 32
    %v2348 = vpop.permute.xlu0 %2347
    %2351 = vrot.lane.b32.xlu0 %v2336, 112
    %v2352 = vpop.permute.xlu0 %2351
    %2355 = vrot.lane.b32.xlu0 %v2341, 64
    %v2356 = vpop.permute.xlu0 %2355
    %v2358 = vsel %vm2312, %v2321, %v2344
    %vm2359 = vcmask 261120
    %v2360 = vsel %vm2359, %v2344, %v2348
    %v2361 = vsel %vm2159, %v2360, %v2352
    %vm2362 = vcmask 523264
    %v2363 = vsel %vm2362, %v2352, %v2356
    %v2364 = vpack.c.bf16 %v2358, %v2358
    %v2365 = vpack.c.bf16 %v2361, %v2361
    %v2366 = vpack.c.bf16 %v2363, %v2363
    %v2367 = vpack.c.bf16 %v2356, %v2356
    %v2368 = vld [vmem:[%s7] sm:$0xf]
    %v2369 = vld [vmem:[%s7 + $0x4] sm:$0xf]
    %v2370 = vld [vmem:[%s7 + $0x8] sm:$0xf]
    %v2371 = vld [vmem:[%s7 + $0xc] sm:$0xf]
    %v2372 = vld [vmem:[%s7 + $0x10] sm:$0xf]
    %v2373 = vld [vmem:[%s7 + $0x14] sm:$0xf]
    %v2374 = vld [vmem:[%s7 + $0x18] sm:$0xf]
    %v2375 = vld [vmem:[%s7 + $0x1c] sm:$0xf]
    %v2376 = vld [vmem:[%s7 + $0x20] sm:$0xf]
    %v2377 = vld [vmem:[%s7 + $0x24] sm:$0xf]
    %v2378 = vld [vmem:[%s7 + $0x28] sm:$0xf]
    %v2379 = vld [vmem:[%s7 + $0x2c] sm:$0xf]
    %v2380 = vld [vmem:[%s7 + $0x30] sm:$0xf]
    %v2381 = vld [vmem:[%s7 + $0x34] sm:$0xf]
    %v2382 = vld [vmem:[%s7 + $0x38] sm:$0xf]
    %v2383 = vld [vmem:[%s7 + $0x3c] sm:$0xf]
    %v2384 = vld [vmem:[%s7 + $0x40] sm:$0xf]
    %v2385 = vld [vmem:[%s7 + $0x44] sm:$0xf]
    %v2386 = vld [vmem:[%s7 + $0x48] sm:$0xf]
    %v2387 = vld [vmem:[%s7 + $0x4c] sm:$0xf]
    %v2388 = vld [vmem:[%s7 + $0x50] sm:$0xf]
    %v2389 = vld [vmem:[%s7 + $0x54] sm:$0xf]
    %v2390 = vld [vmem:[%s7 + $0x58] sm:$0xf]
    %v2391 = vld [vmem:[%s7 + $0x5c] sm:$0xf]
    %v2392 = vld [vmem:[%s7 + $0x60] sm:$0xf]
    %v2393 = vld [vmem:[%s7 + $0x64] sm:$0xf]
    %v2394 = vld [vmem:[%s7 + $0x68] sm:$0xf]
    %v2395 = vld [vmem:[%s7 + $0x6c] sm:$0xf]
    %v2396 = vld [vmem:[%s7 + $0x70] sm:$0xf]
    %v2397 = vld [vmem:[%s7 + $0x74] sm:$0xf]
    %v2398 = vld [vmem:[%s7 + $0x78] sm:$0xf]
    %v2399 = vld [vmem:[%s7 + $0x7c] sm:$0xf]
    %v2400 = vld [vmem:[%s7 + $0x80] sm:$0xf]
    %v2401 = vld [vmem:[%s7 + $0x84] sm:$0xf]
    %v2402 = vld [vmem:[%s7 + $0x88] sm:$0xf]
    %v2403 = vld [vmem:[%s7 + $0x8c] sm:$0xf]
    %v2404 = vld [vmem:[%s7 + $0x90] sm:$0xf]
    %v2405 = vld [vmem:[%s7 + $0x94] sm:$0xf]
    %v2406 = vld [vmem:[%s7 + $0x98] sm:$0xf]
    %v2407 = vld [vmem:[%s7 + $0x9c] sm:$0xf]
    %v2408 = vld [vmem:[%s7 + $0xa0] sm:$0xf]
    %v2409 = vld [vmem:[%s7 + $0xa4] sm:$0xf]
    %v2410 = vld [vmem:[%s7 + $0xa8] sm:$0xf]
    %v2411 = vld [vmem:[%s7 + $0xac] sm:$0xf]
    %v2412 = vld [vmem:[%s7 + $0xb0] sm:$0xf]
    %v2413 = vld [vmem:[%s7 + $0xb4] sm:$0xf]
    %v2414 = vld [vmem:[%s7 + $0xb8] sm:$0xf]
    %v2415 = vld [vmem:[%s7 + $0xbc] sm:$0xf]
    %v2416 = vld [vmem:[%s7 + $0xc0] sm:$0xf]
    %v2417 = vld [vmem:[%s7 + $0xc4] sm:$0xf]
    %v2418 = vld [vmem:[%s8] sm:$0x1]
    %v2420 = vlaneseq
    %v2421 = vshrl.u32 %v2420, 7
    %v2422 = vsub.s32 0, %v2421
    %v2423 = vrot.slane %v2418, %v2422
    %v2475 = vunpack.c.l.b16 %v2368
    %v2476 = vunpack.c.l.b16 %v2369
    %v2477 = vunpack.c.l.b16 %v2370
    %v2478 = vunpack.c.l.b16 %v2371
    %v2479 = vunpack.c.l.b16 %v2372
    %v2480 = vunpack.c.l.b16 %v2373
    %v2481 = vunpack.c.l.b16 %v2374
    %v2482 = vunpack.c.l.b16 %v2375
    %v2483 = vunpack.c.l.b16 %v2376
    %v2484 = vunpack.c.l.b16 %v2377
    %v2485 = vunpack.c.l.b16 %v2378
    %v2486 = vunpack.c.l.b16 %v2379
    %v2487 = vunpack.c.l.b16 %v2380
    %v2488 = vunpack.c.l.b16 %v2381
    %v2489 = vunpack.c.l.b16 %v2382
    %v2490 = vunpack.c.l.b16 %v2383
    %v2491 = vunpack.c.l.b16 %v2384
    %v2492 = vunpack.c.l.b16 %v2385
    %v2493 = vunpack.c.l.b16 %v2386
    %v2494 = vunpack.c.l.b16 %v2387
    %v2495 = vunpack.c.l.b16 %v2388
    %v2496 = vunpack.c.l.b16 %v2389
    %v2497 = vunpack.c.l.b16 %v2390
    %v2498 = vunpack.c.l.b16 %v2391
    %v2499 = vunpack.c.l.b16 %v2392
    %v2500 = vunpack.c.l.b16 %v2393
    %v2501 = vunpack.c.l.b16 %v2394
    %v2502 = vunpack.c.l.b16 %v2395
    %v2503 = vunpack.c.l.b16 %v2396
    %v2504 = vunpack.c.l.b16 %v2397
    %v2505 = vunpack.c.l.b16 %v2398
    %v2506 = vunpack.c.l.b16 %v2399
    %v2507 = vunpack.c.l.b16 %v2400
    %v2508 = vunpack.c.l.b16 %v2401
    %v2509 = vunpack.c.l.b16 %v2402
    %v2510 = vunpack.c.l.b16 %v2403
    %v2511 = vunpack.c.l.b16 %v2404
    %v2512 = vunpack.c.l.b16 %v2405
    %v2513 = vunpack.c.l.b16 %v2406
    %v2514 = vunpack.c.l.b16 %v2407
    %v2515 = vunpack.c.l.b16 %v2408
    %v2516 = vunpack.c.l.b16 %v2409
    %v2517 = vunpack.c.l.b16 %v2410
    %v2518 = vunpack.c.l.b16 %v2411
    %v2519 = vunpack.c.l.b16 %v2412
    %v2520 = vunpack.c.l.b16 %v2413
    %v2521 = vunpack.c.l.b16 %v2414
    %v2522 = vunpack.c.l.b16 %v2415
    %v2523 = vunpack.c.l.b16 %v2416
    %v2524 = vunpack.c.l.b16 %v2417
    %v2525 = vpack.c.b16 %v2476, %v2475
    %v2526 = vpack.c.b16 %v2478, %v2477
    %v2527 = vpack.c.b16 %v2480, %v2479
    %v2528 = vpack.c.b16 %v2482, %v2481
    %v2529 = vpack.c.b16 %v2484, %v2483
    %v2530 = vpack.c.b16 %v2486, %v2485
    %v2531 = vpack.c.b16 %v2488, %v2487
    %v2532 = vpack.c.b16 %v2490, %v2489
    %v2533 = vpack.c.b16 %v2492, %v2491
    %v2534 = vpack.c.b16 %v2494, %v2493
    %v2535 = vpack.c.b16 %v2496, %v2495
    %v2536 = vpack.c.b16 %v2498, %v2497
    %v2537 = vpack.c.b16 %v2500, %v2499
    %v2538 = vpack.c.b16 %v2502, %v2501
    %v2539 = vpack.c.b16 %v2504, %v2503
    %v2540 = vpack.c.b16 %v2506, %v2505
    %v2541 = vpack.c.b16 %v2508, %v2507
    %v2542 = vpack.c.b16 %v2510, %v2509
    %v2543 = vpack.c.b16 %v2512, %v2511
    %v2544 = vpack.c.b16 %v2514, %v2513
    %v2545 = vpack.c.b16 %v2516, %v2515
    %v2546 = vpack.c.b16 %v2518, %v2517
    %v2547 = vpack.c.b16 %v2520, %v2519
    %v2548 = vpack.c.b16 %v2522, %v2521
    %v2549 = vpack.c.b16 %v2524, %v2523
    %v2576 = vsel %vm2256, %v2367, 0
    %2578 = vmatprep.subr.bf16.mxu0 0
    %2579 = vmatpush1.bf16.msra.mxu0 %v2532
    %2580 = vmatprep.subr.bf16.mxu0 0
    %2581 = vmatpush1.bf16.msra.mxu0 %v2531
    %2582 = vmatprep.subr.bf16.mxu0 0
    %2583 = vmatpush1.bf16.msra.mxu0 %v2530
    %2584 = vmatprep.subr.bf16.mxu0 0
    %2585 = vmatpush1.bf16.msra.mxu0 %v2529
    %2586 = vmatprep.subr.bf16.mxu0 0
    %2587 = vmatpush1.bf16.msra.mxu0 %v2528
    %2588 = vmatprep.subr.bf16.mxu0 0
    %2589 = vmatpush1.bf16.msra.mxu0 %v2527
    %2590 = vmatprep.subr.bf16.mxu0 0
    %2591 = vmatpush1.bf16.msra.mxu0 %v2526
    %2592 = vmatprep.subr.bf16.mxu0 0
    %2593 = vmatpush1.bf16.msra.mxu0 %v2525
    %2594 = vmatprep.subr.bf16.mxu0 0
    %2595 = vmatpush2.bf16.msra.mxu0 %v2540
    %2596 = vmatprep.subr.bf16.mxu0 0
    %2597 = vmatpush2.bf16.msra.mxu0 %v2539
    %2598 = vmatprep.subr.bf16.mxu0 0
    %2599 = vmatpush2.bf16.msra.mxu0 %v2538
    %2600 = vmatprep.subr.bf16.mxu0 0
    %2601 = vmatpush2.bf16.msra.mxu0 %v2537
    %2602 = vmatprep.subr.bf16.mxu0 0
    %2603 = vmatpush2.bf16.msra.mxu0 %v2536
    %2604 = vmatprep.subr.bf16.mxu0 0
    %2605 = vmatpush2.bf16.msra.mxu0 %v2535
    %2606 = vmatprep.subr.bf16.mxu0 0
    %2607 = vmatpush2.bf16.msra.mxu0 %v2534
    %2608 = vmatprep.subr.bf16.mxu0 0
    %2609 = vmatpush2.bf16.msra.mxu0 %v2533
    %2610 = vmatprep.mubr.bf16.mxu0 %v2365
    %2611 = vmatmul.mubr.bf16.gmra.mxu0 %v2364
    %v2612 = vpop.f32.mrf.mxu0
    %v2613 = vadd.f32 %v2423, %v2612
    %v2614 = vpop.f32.mrf.mxu0
    %v2615 = vpop.f32.mrf.mxu0
    %v2616 = vpop.f32.mrf.mxu0
    %2617 = vdwg.mxu0
    %2618 = vmatprep.subr.bf16.mxu0 0
    %2619 = vmatpush1.bf16.msra.mxu0 %v2548
    %2620 = vmatprep.subr.bf16.mxu0 0
    %2621 = vmatpush1.bf16.msra.mxu0 %v2547
    %2622 = vmatprep.subr.bf16.mxu0 0
    %2623 = vmatpush1.bf16.msra.mxu0 %v2546
    %2624 = vmatprep.subr.bf16.mxu0 0
    %2625 = vmatpush1.bf16.msra.mxu0 %v2545
    %2626 = vmatprep.subr.bf16.mxu0 0
    %2627 = vmatpush1.bf16.msra.mxu0 %v2544
    %2628 = vmatprep.subr.bf16.mxu0 0
    %2629 = vmatpush1.bf16.msra.mxu0 %v2543
    %2630 = vmatprep.subr.bf16.mxu0 0
    %2631 = vmatpush1.bf16.msra.mxu0 %v2542
    %2632 = vmatprep.subr.bf16.mxu0 0
    %2633 = vmatpush1.bf16.msra.mxu0 %v2541
    %2634 = vmatprep.subr.bf16.mxu0 0
    %2635 = vmatpush2.bf16.msra.mxu0 0
    %2636 = vmatprep.subr.bf16.mxu0 0
    %2637 = vmatpush2.bf16.msra.mxu0 0
    %2638 = vmatprep.subr.bf16.mxu0 0
    %2639 = vmatpush2.bf16.msra.mxu0 0
    %2640 = vmatprep.subr.bf16.mxu0 0
    %2641 = vmatpush2.bf16.msra.mxu0 0
    %2642 = vmatprep.subr.bf16.mxu0 0
    %2643 = vmatpush2.bf16.msra.mxu0 0
    %2644 = vmatprep.subr.bf16.mxu0 0
    %2645 = vmatpush2.bf16.msra.mxu0 0
    %2646 = vmatprep.subr.bf16.mxu0 0
    %2647 = vmatpush2.bf16.msra.mxu0 0
    %2648 = vmatprep.subr.bf16.mxu0 0
    %2649 = vmatpush2.bf16.msra.mxu0 %v2549
    %2650 = vmatprep.mubr.bf16.mxu0 %v2576
    %2651 = vmatmul.mubr.bf16.gmra.mxu0 %v2366
    %v2652 = vpop.f32.mrf.mxu0
    %v2653 = vadd.f32 %v2613, %v2652
    %v2654 = vpop.f32.mrf.mxu0
    %v2655 = vpop.f32.mrf.mxu0
    %v2656 = vpop.f32.mrf.mxu0
    %2657 = vdwg.mxu0
    %v2658 = vmax.f32 %v2653, 0.0
    %v2659 = vpack.c.bf16 %v2658, %v2658
    %v2660 = vld [vmem:[%s9] sm:$0xf]
    %v2661 = vld [vmem:[%s9 + $0x4] sm:$0xf]
    %v2662 = vld [vmem:[%s9 + $0x8] sm:$0xf]
    %v2663 = vld [vmem:[%s9 + $0xc] sm:$0xf]
    %v2664 = vld [vmem:[%s9 + $0x10] sm:$0xf]
    %v2665 = vld [vmem:[%s9 + $0x14] sm:$0xf]
    %v2666 = vld [vmem:[%s9 + $0x18] sm:$0xf]
    %v2667 = vld [vmem:[%s9 + $0x1c] sm:$0xf]
    %v2668 = vld [vmem:[%s9 + $0x20] sm:$0xf]
    %v2669 = vld [vmem:[%s9 + $0x24] sm:$0xf]
    %v2670 = vld [vmem:[%s9 + $0x28] sm:$0xf]
    %v2671 = vld [vmem:[%s9 + $0x2c] sm:$0xf]
    %v2672 = vld [vmem:[%s9 + $0x30] sm:$0xf]
    %v2673 = vld [vmem:[%s9 + $0x34] sm:$0xf]
    %v2674 = vld [vmem:[%s9 + $0x38] sm:$0xf]
    %v2675 = vld [vmem:[%s10] sm:$0x1]
    %v2677 = vlaneseq
    %v2678 = vshrl.u32 %v2677, 7
    %v2679 = vsub.s32 0, %v2678
    %v2680 = vrot.slane %v2675, %v2679
    %v2697 = vunpack.c.l.b16 %v2660
    %v2698 = vunpack.c.l.b16 %v2661
    %v2699 = vunpack.c.l.b16 %v2662
    %v2700 = vunpack.c.l.b16 %v2663
    %v2701 = vunpack.c.l.b16 %v2664
    %v2702 = vunpack.c.l.b16 %v2665
    %v2703 = vunpack.c.l.b16 %v2666
    %v2704 = vunpack.c.l.b16 %v2667
    %v2705 = vunpack.c.l.b16 %v2668
    %v2706 = vunpack.c.l.b16 %v2669
    %v2707 = vunpack.c.l.b16 %v2670
    %v2708 = vunpack.c.l.b16 %v2671
    %v2709 = vunpack.c.l.b16 %v2672
    %v2710 = vunpack.c.l.b16 %v2673
    %v2711 = vunpack.c.l.b16 %v2674
    %v2712 = vpack.c.b16 %v2698, %v2697
    %v2713 = vpack.c.b16 %v2700, %v2699
    %v2714 = vpack.c.b16 %v2702, %v2701
    %v2715 = vpack.c.b16 %v2704, %v2703
    %v2716 = vpack.c.b16 %v2706, %v2705
    %v2717 = vpack.c.b16 %v2708, %v2707
    %v2718 = vpack.c.b16 %v2710, %v2709
    %v2719 = vpack.c.b16 %v2711, %v2711
    %vm2727 = vcmask 982016
    %v2729 = vsel %vm2727, %v2659, 0
    %vm2731 = vcmask 1043456
    %v2733 = vsel %vm2731, %v2719, 0
    %2735 = vmatprep.subr.bf16.mxu0 0
    %2736 = vmatpush1.bf16.msra.mxu0 %v2733
    %2737 = vmatprep.subr.bf16.mxu0 0
    %2738 = vmatpush1.bf16.msra.mxu0 %v2718
    %2739 = vmatprep.subr.bf16.mxu0 0
    %2740 = vmatpush1.bf16.msra.mxu0 %v2717
    %2741 = vmatprep.subr.bf16.mxu0 0
    %2742 = vmatpush1.bf16.msra.mxu0 %v2716
    %2743 = vmatprep.subr.bf16.mxu0 0
    %2744 = vmatpush1.bf16.msra.mxu0 %v2715
    %2745 = vmatprep.subr.bf16.mxu0 0
    %2746 = vmatpush1.bf16.msra.mxu0 %v2714
    %2747 = vmatprep.subr.bf16.mxu0 0
    %2748 = vmatpush1.bf16.msra.mxu0 %v2713
    %2749 = vmatprep.subr.bf16.mxu0 0
    %2750 = vmatpush1.bf16.msra.mxu0 %v2712
    %2751 = vmatprep.subr.bf16.mxu0 0
    %2752 = vmatpush2.bf16.msra.mxu0 0
    %2753 = vmatprep.subr.bf16.mxu0 0
    %2754 = vmatpush2.bf16.msra.mxu0 0
    %2755 = vmatprep.subr.bf16.mxu0 0
    %2756 = vmatpush2.bf16.msra.mxu0 0
    %2757 = vmatprep.subr.bf16.mxu0 0
    %2758 = vmatpush2.bf16.msra.mxu0 0
    %2759 = vmatprep.subr.bf16.mxu0 0
    %2760 = vmatpush2.bf16.msra.mxu0 0
    %2761 = vmatprep.subr.bf16.mxu0 0
    %2762 = vmatpush2.bf16.msra.mxu0 0
    %2763 = vmatprep.subr.bf16.mxu0 0
    %2764 = vmatpush2.bf16.msra.mxu0 0
    %2765 = vmatprep.subr.bf16.mxu0 0
    %2766 = vmatpush2.bf16.msra.mxu0 0
    %2767 = vmatprep.mubr.bf16.mxu0 0
    %2768 = vmatmul.mubr.bf16.gmra.mxu0 %v2729
    %v2769 = vpop.f32.mrf.mxu0
    %v2770 = vadd.f32 %v2680, %v2769
    %v2771 = vpop.f32.mrf.mxu0
    %v2772 = vpop.f32.mrf.mxu0
    %v2773 = vpop.f32.mrf.mxu0
    %2774 = vdwg.mxu0
    %v2775 = vmax.f32 %v2770, 0.0
    %v2776 = vpack.c.bf16 %v2775, %v2775
    %v2777 = vld [vmem:[%s11] sm:$0xf]
    %v2778 = vld [vmem:[%s11 + $0x4] sm:$0xf]
    %v2779 = vld [vmem:[%s11 + $0x8] sm:$0xf]
    %v2780 = vld [vmem:[%s11 + $0xc] sm:$0xf]
    %v2781 = vld [vmem:[%s11 + $0x10] sm:$0xf]
    %v2782 = vld [vmem:[%s11 + $0x14] sm:$0xf]
    %v2783 = vld [vmem:[%s11 + $0x18] sm:$0xf]
    %v2784 = vld [vmem:[%s11 + $0x1c] sm:$0xf]
    %v2785 = vld [vmem:[%s11 + $0x20] sm:$0xf]
    %v2786 = vld [vmem:[%s11 + $0x24] sm:$0xf]
    %v2787 = vld [vmem:[%s11 + $0x28] sm:$0x3]
    %v2788 = vld [vmem:[%s12] sm:$0x1]
    %v2790 = vlaneseq
    %v2791 = vshrl.u32 %v2790, 7
    %v2792 = vsub.s32 0, %v2791
    %v2793 = vrot.slane %v2788, %v2792
    %v2806 = vunpack.c.l.b16 %v2777
    %v2807 = vunpack.c.l.b16 %v2778
    %v2808 = vunpack.c.l.b16 %v2779
    %v2809 = vunpack.c.l.b16 %v2780
    %v2810 = vunpack.c.l.b16 %v2781
    %v2811 = vunpack.c.l.b16 %v2782
    %v2812 = vunpack.c.l.b16 %v2783
    %v2813 = vunpack.c.l.b16 %v2784
    %v2814 = vunpack.c.l.b16 %v2785
    %v2815 = vunpack.c.l.b16 %v2786
    %v2816 = vunpack.c.l.b16 %v2787
    %v2817 = vpack.c.b16 %v2807, %v2806
    %v2818 = vpack.c.b16 %v2809, %v2808
    %v2819 = vpack.c.b16 %v2811, %v2810
    %v2820 = vpack.c.b16 %v2813, %v2812
    %v2821 = vpack.c.b16 %v2815, %v2814
    %v2822 = vpack.c.b16 %v2816, %v2816
    %v2829 = vsel %vm1306, %v2776, 0
    %v2832 = vsel %vm1470, %v2822, 0
    %2834 = vmatprep.subr.bf16.mxu0 0
    %2835 = vmatpush1.bf16.msra.mxu0 0
    %2836 = vmatprep.subr.bf16.mxu0 0
    %2837 = vmatpush1.bf16.msra.mxu0 0
    %2838 = vmatprep.subr.bf16.mxu0 0
    %2839 = vmatpush1.bf16.msra.mxu0 %v2832
    %2840 = vmatprep.subr.bf16.mxu0 0
    %2841 = vmatpush1.bf16.msra.mxu0 %v2821
    %2842 = vmatprep.subr.bf16.mxu0 0
    %2843 = vmatpush1.bf16.msra.mxu0 %v2820
    %2844 = vmatprep.subr.bf16.mxu0 0
    %2845 = vmatpush1.bf16.msra.mxu0 %v2819
    %2846 = vmatprep.subr.bf16.mxu0 0
    %2847 = vmatpush1.bf16.msra.mxu0 %v2818
    %2848 = vmatprep.subr.bf16.mxu0 0
    %2849 = vmatpush1.bf16.msra.mxu0 %v2817
    %2850 = vmatprep.subr.bf16.mxu0 0
    %2851 = vmatpush2.bf16.msra.mxu0 0
    %2852 = vmatprep.subr.bf16.mxu0 0
    %2853 = vmatpush2.bf16.msra.mxu0 0
    %2854 = vmatprep.subr.bf16.mxu0 0
    %2855 = vmatpush2.bf16.msra.mxu0 0
    %2856 = vmatprep.subr.bf16.mxu0 0
    %2857 = vmatpush2.bf16.msra.mxu0 0
    %2858 = vmatprep.subr.bf16.mxu0 0
    %2859 = vmatpush2.bf16.msra.mxu0 0
    %2860 = vmatprep.subr.bf16.mxu0 0
    %2861 = vmatpush2.bf16.msra.mxu0 0
    %2862 = vmatprep.subr.bf16.mxu0 0
    %2863 = vmatpush2.bf16.msra.mxu0 0
    %2864 = vmatprep.subr.bf16.mxu0 0
    %2865 = vmatpush2.bf16.msra.mxu0 0
    %2866 = vmatprep.mubr.bf16.mxu0 0
    %2867 = vmatmul.mubr.bf16.gmra.mxu0 %v2829
    %v2868 = vpop.f32.mrf.mxu0
    %v2869 = vadd.f32 %v2793, %v2868
    %v2870 = vpop.f32.mrf.mxu0
    %v2871 = vpop.f32.mrf.mxu0
    %v2872 = vpop.f32.mrf.mxu0
    %2873 = vdwg.mxu0
    %vm2874 = vcmask 74752
    %2875 = vst.msk [vmem:[#allocation5] sm:$0x3] %vm2874, %v2869
    // Predicated region
    $region54: #{lenet_forward.1} parent=1 // pred_check
      _
    $region55: #{lenet_forward.1} parent=1 // pred_check_branch
      %2877 = sbr.rel (0) target = $region57
    $region56: #{lenet_forward.1} parent=1 // pred_region
      %s2879 = ssub.s32 32, 32
      %2880 = vsyncadd [#allocation6], %s2879
      %s2882 = sshll.u32 [#allocation5], 4
      %s2883 = int_to_ptr.vmem [resolvable:$true] %s2882
      %2885 = dma.vmem_to_hbm [thread:$0]  %s2883, 32, %s13, [#allocation6]
    $region57: #{lenet_forward.1} parent=1 // pred_fallthru
      _
    // Predicated region
    $region58: #{lenet_forward.1} parent=1 // pred_check
      _
    $region59: #{lenet_forward.1} parent=1 // pred_check_branch
      %2887 = sbr.rel (0) target = $region61
    $region60: #{lenet_forward.1} parent=1 // pred_region
      %2888 = dma.done [#allocation6], 32
    $region61: #{lenet_forward.1} parent=1 // pred_fallthru
      _
    %2889 = vsyncpa [#allocation6], 1

</llo_original>
